<compile_context>
chip_gen: v5e
topology: v5e:2x2
jax: 0.10.0
libtpu: 0.0.40
codegen_flags: <defaults>
</compile_context>

<pallas_src>
import jax
import jax.numpy as jnp
import numpy as np
from jax.experimental import pallas as pl
from jax.experimental.pallas import tpu as pltpu


def gru_head_kernel(ids_ref, emb_ref, wi_ref, wh_ref, b_ref,
                    fcw_ref, fcb_ref, alpha_ref, out_ref):
    """Fused embed-gather + GRU recurrence + l2norm + Linear + PReLU."""
    SB = ids_ref.shape[0]            # S * B, time-major rows
    V, D = emb_ref.shape
    H = wh_ref.shape[2]
    B = out_ref.shape[0]
    S = SB // B

    # ---- fused frozen-embedding gather: one_hot(ids) @ table (MXU) ----
    ids = ids_ref[...]                                              # (S*B, 1) i32
    onehot = (ids == jax.lax.broadcasted_iota(jnp.int32, (SB, V), 1)
              ).astype(jnp.float32)                                 # (S*B, V)
    x = jnp.dot(onehot, emb_ref[...],
                preferred_element_type=jnp.float32)                 # (S*B, D)

    # ---- hoisted per-gate weight/bias loads (loaded exactly once) ----
    w_ir, w_iz, w_in = wi_ref[0], wi_ref[1], wi_ref[2]              # (D, H)
    w_hr, w_hz, w_hn = wh_ref[0], wh_ref[1], wh_ref[2]              # (H, H)
    b_r, b_z, b_in, b_hn = b_ref[0], b_ref[1], b_ref[2], b_ref[3]   # (1, H)

    # ---- input projections for all timesteps at once (time-major rows) ----
    gx_r = jnp.dot(x, w_ir, preferred_element_type=jnp.float32) + b_r
    gx_z = jnp.dot(x, w_iz, preferred_element_type=jnp.float32) + b_z
    gx_n = jnp.dot(x, w_in, preferred_element_type=jnp.float32) + b_in

    # ---- GRU recurrence (PyTorch gate order r, z, n) ----
    # S is tiny here, so a full unroll (== lax.fori_loop(..., unroll=True)) is
    # the right choice; for long S convert to fori_loop over a VMEM scratch.
    h = jnp.zeros((B, H), jnp.float32)
    for t in range(S):
        lo, hi = t * B, (t + 1) * B                 # static contiguous rows
        ghr = jnp.dot(h, w_hr, preferred_element_type=jnp.float32)
        ghz = jnp.dot(h, w_hz, preferred_element_type=jnp.float32)
        ghn = jnp.dot(h, w_hn, preferred_element_type=jnp.float32) + b_hn
        r = jax.nn.sigmoid(gx_r[lo:hi, :] + ghr)
        z = jax.nn.sigmoid(gx_z[lo:hi, :] + ghz)
        n = jnp.tanh(gx_n[lo:hi, :] + r * ghn)
        h = (1.0 - z) * n + z * h

    # ---- h = l2norm(h[-1]) (num_layers == 1) ----
    inv_norm = jax.lax.rsqrt(jnp.sum(h * h, axis=-1, keepdims=True) + 1e-12)
    h_n = h * inv_norm

    # ---- dropout: eval-mode identity; fc: Linear(H, O); PReLU ----
    o = jnp.dot(h_n, fcw_ref[...],
                preferred_element_type=jnp.float32) + fcb_ref[...]
    alpha = alpha_ref[0, 0]                                         # SMEM scalar
    out_ref[...] = jnp.where(o >= 0.0, o, o * alpha)


def prepare_params(embed_table, w_ih, w_hh, b_ih, b_hh, fc_w, fc_b, prelu_alpha):
    """One-time packing of frozen parameters into kernel-friendly layouts."""
    H = w_hh.shape[1]
    f32 = jnp.float32
    w_i = jnp.stack([w_ih[0:H].T, w_ih[H:2 * H].T, w_ih[2 * H:3 * H].T]).astype(f32)
    w_h = jnp.stack([w_hh[0:H].T, w_hh[H:2 * H].T, w_hh[2 * H:3 * H].T]).astype(f32)
    # r/z input+hidden biases merge (they add before the sigmoid); the hidden
    # n-gate bias must stay separate because it sits inside the r* term.
    b = jnp.stack([
        (b_ih[0:H] + b_hh[0:H]).reshape(1, H),
        (b_ih[H:2 * H] + b_hh[H:2 * H]).reshape(1, H),
        b_ih[2 * H:3 * H].reshape(1, H),
        b_hh[2 * H:3 * H].reshape(1, H),
    ]).astype(f32)                                                   # (4, 1, H)
    return dict(
        emb=embed_table.astype(f32),                                 # (V, D)
        w_i=w_i, w_h=w_h, b=b,                                       # (3,D,H),(3,H,H),(4,1,H)
        fc_w=fc_w.T.astype(f32),                                     # (H, O)
        fc_b=fc_b.reshape(1, -1).astype(f32),                        # (1, O)
        alpha=jnp.full((1, 1), prelu_alpha, f32),                    # SMEM scalar
    )


@jax.jit
def model_forward(x_ids, params):
    B, S = x_ids.shape
    V, D = params["emb"].shape
    H = params["w_h"].shape[2]
    O = params["fc_w"].shape[1]

    # Time-major flat token ids; the gather itself happens inside the kernel.
    ids_tm = jnp.transpose(x_ids).reshape(S * B, 1).astype(jnp.int32)

    vmem = pl.BlockSpec(memory_space=pltpu.MemorySpace.VMEM)
    smem = pl.BlockSpec(memory_space=pltpu.MemorySpace.SMEM)

    flops = (2 * S * B * V * D            # one-hot gather matmul
             + 3 * 2 * S * B * D * H      # input projections (r,z,n)
             + S * 3 * 2 * B * H * H      # recurrent projections
             + 2 * B * H * O)             # fc
    transcendentals = S * B * 3 * H + B
    bytes_accessed = 4 * (S * B + V * D + 3 * D * H + 3 * H * H + 4 * H
                          + H * O + O + 1 + B * O)

    return pl.pallas_call(
        gru_head_kernel,
        out_shape=jax.ShapeDtypeStruct((B, O), jnp.float32),
        in_specs=[vmem] * 7 + [smem],
        out_specs=vmem,
        cost_estimate=pl.CostEstimate(flops=flops,
                                      transcendentals=transcendentals,
                                      bytes_accessed=bytes_accessed),
    )(ids_tm, params["emb"], params["w_i"], params["w_h"], params["b"],
      params["fc_w"], params["fc_b"], params["alpha"])


def reference_forward(x_ids, embed_table, w_ih, w_hh, b_ih, b_hh,
                      fc_w, fc_b, prelu_alpha):
    """Pure-JAX reference matching the configured PyTorch branch."""
    hp = jax.lax.Precision.HIGHEST
    emb = jnp.take(embed_table, x_ids, axis=0)          # (B, S, D)
    B, S, _ = emb.shape
    H = w_hh.shape[1]
    h = jnp.zeros((B, H), jnp.float32)
    for t in range(S):
        gi = jnp.dot(emb[:, t, :], w_ih.T, precision=hp) + b_ih
        gh = jnp.dot(h, w_hh.T, precision=hp) + b_hh
        r = jax.nn.sigmoid(gi[:, 0:H] + gh[:, 0:H])
        z = jax.nn.sigmoid(gi[:, H:2 * H] + gh[:, H:2 * H])
        n = jnp.tanh(gi[:, 2 * H:] + r * gh[:, 2 * H:])
        h = (1.0 - z) * n + z * h
    h = h / jnp.linalg.norm(h, axis=-1, keepdims=True)
    o = jnp.dot(h, fc_w.T, precision=hp) + fc_b
    return jnp.where(o >= 0.0, o, prelu_alpha * o)


if __name__ == "__main__":
    # Small shapes consistent with the module: batch=2, seq=8, vocab=16,
    # input_size(=embedding dim)=32, hidden_size=32, output_size=4.
    B, S, V, D, H, O = 2, 8, 16, 32, 32, 4

    key = jax.random.PRNGKey(0)
    k = jax.random.split(key, 8)

    embed_table = jax.random.normal(k[0], (V, D), jnp.float32)
    x_ids = jax.random.randint(k[1], (B, S), 0, V, jnp.int32)

    # PyTorch-style GRU init: uniform(-1/sqrt(H), 1/sqrt(H)).
    s = 1.0 / float(H) ** 0.5
    w_ih = jax.random.uniform(k[2], (3 * H, D), jnp.float32, -s, s)
    w_hh = jax.random.uniform(k[3], (3 * H, H), jnp.float32, -s, s)
    b_ih = jax.random.uniform(k[4], (3 * H,), jnp.float32, -s, s)
    b_hh = jax.random.uniform(k[5], (3 * H,), jnp.float32, -s, s)

    # fc: xavier_uniform weight, default-uniform bias; PReLU alpha = 0.25.
    limit = (6.0 / (H + O)) ** 0.5
    fc_w = jax.random.uniform(k[6], (O, H), jnp.float32, -limit, limit)
    fc_b = jax.random.uniform(k[7], (O,), jnp.float32, -s, s)
    prelu_alpha = 0.25

    params = prepare_params(embed_table, w_ih, w_hh, b_ih, b_hh,
                            fc_w, fc_b, prelu_alpha)
    out = model_forward(x_ids, params)
    jax.block_until_ready(out)

    ref = reference_forward(x_ids, embed_table, w_ih, w_hh, b_ih, b_hh,
                            fc_w, fc_b, prelu_alpha)
    np.testing.assert_allclose(np.asarray(out), np.asarray(ref),
                               rtol=5e-3, atol=5e-3)

    assert out.shape == (B, O) and out.dtype == jnp.float32
    print("KERNEL_OK")
</pallas_src>

<mosaic_0001>
module attributes {stable_mosaic.version = 11 : i64} {
  func.func @gru_head_kernel(%arg0: memref<16x1xi32, #tpu.memory_space<vmem>>, %arg1: memref<16x32xf32, #tpu.memory_space<vmem>>, %arg2: memref<3x32x32xf32, #tpu.memory_space<vmem>>, %arg3: memref<3x32x32xf32, #tpu.memory_space<vmem>>, %arg4: memref<4x1x32xf32, #tpu.memory_space<vmem>>, %arg5: memref<32x4xf32, #tpu.memory_space<vmem>>, %arg6: memref<1x4xf32, #tpu.memory_space<vmem>>, %arg7: memref<1x1xf32, #tpu.memory_space<smem>>, %arg8: memref<2x4xf32, #tpu.memory_space<vmem>>) attributes {dimension_semantics = [], scalar_prefetch = 0 : i64, scratch_operands = 0 : i64, tpu.core_type = #tpu.core_type<tc>} {
    %c0 = arith.constant 0 : index
    %c0_0 = arith.constant 0 : index
    %0 = vector.load %arg0[%c0, %c0_0] : memref<16x1xi32, #tpu.memory_space<vmem>>, vector<16x1xi32>
    %1 = tpu.iota {dimensions = array<i32: 1>} : vector<16x16xi32>
    %2 = vector.broadcast %0 : vector<16x1xi32> to vector<16x16xi32>
    %3 = arith.cmpi eq, %2, %1 : vector<16x16xi32>
    %4 = arith.extui %3 : vector<16x16xi1> to vector<16x16xi32>
    %5 = arith.sitofp %4 : vector<16x16xi32> to vector<16x16xf32>
    %c0_1 = arith.constant 0 : index
    %c0_2 = arith.constant 0 : index
    %6 = vector.load %arg1[%c0_1, %c0_2] : memref<16x32xf32, #tpu.memory_space<vmem>>, vector<16x32xf32>
    %cst = arith.constant dense<0.000000e+00> : vector<16x32xf32>
    %7 = tpu.matmul %5, %6, %cst {dimension_numbers = #tpu.dot_dimension_numbers<[1], [0], [0], [1], [0, 0, 1, 1], [], []>} : vector<16x16xf32>, vector<16x32xf32>, vector<16x32xf32> -> vector<16x32xf32>
    %c0_3 = arith.constant 0 : index
    %c0_4 = arith.constant 0 : index
    %c0_5 = arith.constant 0 : index
    %8 = vector.load %arg2[%c0_3, %c0_4, %c0_5] : memref<3x32x32xf32, #tpu.memory_space<vmem>>, vector<1x32x32xf32>
    %9 = vector.shape_cast %8 : vector<1x32x32xf32> to vector<32x32xf32>
    %c1 = arith.constant 1 : index
    %c0_6 = arith.constant 0 : index
    %c0_7 = arith.constant 0 : index
    %10 = vector.load %arg2[%c1, %c0_6, %c0_7] : memref<3x32x32xf32, #tpu.memory_space<vmem>>, vector<1x32x32xf32>
    %11 = vector.shape_cast %10 : vector<1x32x32xf32> to vector<32x32xf32>
    %c2 = arith.constant 2 : index
    %c0_8 = arith.constant 0 : index
    %c0_9 = arith.constant 0 : index
    %12 = vector.load %arg2[%c2, %c0_8, %c0_9] : memref<3x32x32xf32, #tpu.memory_space<vmem>>, vector<1x32x32xf32>
    %13 = vector.shape_cast %12 : vector<1x32x32xf32> to vector<32x32xf32>
    %c0_10 = arith.constant 0 : index
    %c0_11 = arith.constant 0 : index
    %c0_12 = arith.constant 0 : index
    %14 = vector.load %arg3[%c0_10, %c0_11, %c0_12] : memref<3x32x32xf32, #tpu.memory_space<vmem>>, vector<1x32x32xf32>
    %15 = vector.shape_cast %14 : vector<1x32x32xf32> to vector<32x32xf32>
    %c1_13 = arith.constant 1 : index
    %c0_14 = arith.constant 0 : index
    %c0_15 = arith.constant 0 : index
    %16 = vector.load %arg3[%c1_13, %c0_14, %c0_15] : memref<3x32x32xf32, #tpu.memory_space<vmem>>, vector<1x32x32xf32>
    %17 = vector.shape_cast %16 : vector<1x32x32xf32> to vector<32x32xf32>
    %c2_16 = arith.constant 2 : index
    %c0_17 = arith.constant 0 : index
    %c0_18 = arith.constant 0 : index
    %18 = vector.load %arg3[%c2_16, %c0_17, %c0_18] : memref<3x32x32xf32, #tpu.memory_space<vmem>>, vector<1x32x32xf32>
    %19 = vector.shape_cast %18 : vector<1x32x32xf32> to vector<32x32xf32>
    %c0_19 = arith.constant 0 : index
    %c0_20 = arith.constant 0 : index
    %c0_21 = arith.constant 0 : index
    %20 = vector.load %arg4[%c0_19, %c0_20, %c0_21] : memref<4x1x32xf32, #tpu.memory_space<vmem>>, vector<1x1x32xf32>
    %21 = vector.shape_cast %20 : vector<1x1x32xf32> to vector<1x32xf32>
    %c1_22 = arith.constant 1 : index
    %c0_23 = arith.constant 0 : index
    %c0_24 = arith.constant 0 : index
    %22 = vector.load %arg4[%c1_22, %c0_23, %c0_24] : memref<4x1x32xf32, #tpu.memory_space<vmem>>, vector<1x1x32xf32>
    %23 = vector.shape_cast %22 : vector<1x1x32xf32> to vector<1x32xf32>
    %c2_25 = arith.constant 2 : index
    %c0_26 = arith.constant 0 : index
    %c0_27 = arith.constant 0 : index
    %24 = vector.load %arg4[%c2_25, %c0_26, %c0_27] : memref<4x1x32xf32, #tpu.memory_space<vmem>>, vector<1x1x32xf32>
    %25 = vector.shape_cast %24 : vector<1x1x32xf32> to vector<1x32xf32>
    %c3 = arith.constant 3 : index
    %c0_28 = arith.constant 0 : index
    %c0_29 = arith.constant 0 : index
    %26 = vector.load %arg4[%c3, %c0_28, %c0_29] : memref<4x1x32xf32, #tpu.memory_space<vmem>>, vector<1x1x32xf32>
    %27 = vector.shape_cast %26 : vector<1x1x32xf32> to vector<1x32xf32>
    %cst_30 = arith.constant dense<0.000000e+00> : vector<16x32xf32>
    %28 = tpu.matmul %7, %9, %cst_30 {dimension_numbers = #tpu.dot_dimension_numbers<[1], [0], [0], [1], [0, 0, 1, 1], [], []>} : vector<16x32xf32>, vector<32x32xf32>, vector<16x32xf32> -> vector<16x32xf32>
    %29 = vector.broadcast %21 : vector<1x32xf32> to vector<16x32xf32>
    %30 = arith.addf %28, %29 : vector<16x32xf32>
    %cst_31 = arith.constant dense<0.000000e+00> : vector<16x32xf32>
    %31 = tpu.matmul %7, %11, %cst_31 {dimension_numbers = #tpu.dot_dimension_numbers<[1], [0], [0], [1], [0, 0, 1, 1], [], []>} : vector<16x32xf32>, vector<32x32xf32>, vector<16x32xf32> -> vector<16x32xf32>
    %32 = vector.broadcast %23 : vector<1x32xf32> to vector<16x32xf32>
    %33 = arith.addf %31, %32 : vector<16x32xf32>
    %cst_32 = arith.constant dense<0.000000e+00> : vector<16x32xf32>
    %34 = tpu.matmul %7, %13, %cst_32 {dimension_numbers = #tpu.dot_dimension_numbers<[1], [0], [0], [1], [0, 0, 1, 1], [], []>} : vector<16x32xf32>, vector<32x32xf32>, vector<16x32xf32> -> vector<16x32xf32>
    %35 = vector.broadcast %25 : vector<1x32xf32> to vector<16x32xf32>
    %36 = arith.addf %34, %35 : vector<16x32xf32>
    %cst_33 = arith.constant 0.000000e+00 : f32
    %37 = vector.broadcast %cst_33 : f32 to vector<2x32xf32>
    %cst_34 = arith.constant dense<0.000000e+00> : vector<2x32xf32>
    %38 = tpu.matmul %37, %15, %cst_34 {dimension_numbers = #tpu.dot_dimension_numbers<[1], [0], [0], [1], [0, 0, 1, 1], [], []>} : vector<2x32xf32>, vector<32x32xf32>, vector<2x32xf32> -> vector<2x32xf32>
    %cst_35 = arith.constant dense<0.000000e+00> : vector<2x32xf32>
    %39 = tpu.matmul %37, %17, %cst_35 {dimension_numbers = #tpu.dot_dimension_numbers<[1], [0], [0], [1], [0, 0, 1, 1], [], []>} : vector<2x32xf32>, vector<32x32xf32>, vector<2x32xf32> -> vector<2x32xf32>
    %cst_36 = arith.constant dense<0.000000e+00> : vector<2x32xf32>
    %40 = tpu.matmul %37, %19, %cst_36 {dimension_numbers = #tpu.dot_dimension_numbers<[1], [0], [0], [1], [0, 0, 1, 1], [], []>} : vector<2x32xf32>, vector<32x32xf32>, vector<2x32xf32> -> vector<2x32xf32>
    %41 = vector.broadcast %27 : vector<1x32xf32> to vector<2x32xf32>
    %42 = arith.addf %40, %41 : vector<2x32xf32>
    %43 = vector.extract_strided_slice %30 {offsets = [0, 0], sizes = [2, 32], strides = [1, 1]} : vector<16x32xf32> to vector<2x32xf32>
    %44 = arith.addf %43, %38 : vector<2x32xf32>
    %45 = arith.negf %44 : vector<2x32xf32>
    %46 = math.exp %45 : vector<2x32xf32>
    %cst_37 = arith.constant 1.000000e+00 : f32
    %47 = vector.broadcast %cst_37 : f32 to vector<2x32xf32>
    %48 = arith.addf %47, %46 : vector<2x32xf32>
    %49 = arith.divf %47, %48 : vector<2x32xf32>
    %50 = vector.extract_strided_slice %33 {offsets = [0, 0], sizes = [2, 32], strides = [1, 1]} : vector<16x32xf32> to vector<2x32xf32>
    %51 = arith.addf %50, %39 : vector<2x32xf32>
    %52 = arith.negf %51 : vector<2x32xf32>
    %53 = math.exp %52 : vector<2x32xf32>
    %cst_38 = arith.constant 1.000000e+00 : f32
    %54 = vector.broadcast %cst_38 : f32 to vector<2x32xf32>
    %55 = arith.addf %54, %53 : vector<2x32xf32>
    %56 = arith.divf %54, %55 : vector<2x32xf32>
    %57 = vector.extract_strided_slice %36 {offsets = [0, 0], sizes = [2, 32], strides = [1, 1]} : vector<16x32xf32> to vector<2x32xf32>
    %58 = arith.mulf %49, %42 : vector<2x32xf32>
    %59 = arith.addf %57, %58 : vector<2x32xf32>
    %60 = math.tanh %59 : vector<2x32xf32>
    %cst_39 = arith.constant 1.000000e+00 : f32
    %61 = vector.broadcast %cst_39 : f32 to vector<2x32xf32>
    %62 = arith.subf %61, %56 : vector<2x32xf32>
    %63 = arith.mulf %62, %60 : vector<2x32xf32>
    %64 = arith.mulf %56, %37 : vector<2x32xf32>
    %65 = arith.addf %63, %64 : vector<2x32xf32>
    %cst_40 = arith.constant dense<0.000000e+00> : vector<2x32xf32>
    %66 = tpu.matmul %65, %15, %cst_40 {dimension_numbers = #tpu.dot_dimension_numbers<[1], [0], [0], [1], [0, 0, 1, 1], [], []>} : vector<2x32xf32>, vector<32x32xf32>, vector<2x32xf32> -> vector<2x32xf32>
    %cst_41 = arith.constant dense<0.000000e+00> : vector<2x32xf32>
    %67 = tpu.matmul %65, %17, %cst_41 {dimension_numbers = #tpu.dot_dimension_numbers<[1], [0], [0], [1], [0, 0, 1, 1], [], []>} : vector<2x32xf32>, vector<32x32xf32>, vector<2x32xf32> -> vector<2x32xf32>
    %cst_42 = arith.constant dense<0.000000e+00> : vector<2x32xf32>
    %68 = tpu.matmul %65, %19, %cst_42 {dimension_numbers = #tpu.dot_dimension_numbers<[1], [0], [0], [1], [0, 0, 1, 1], [], []>} : vector<2x32xf32>, vector<32x32xf32>, vector<2x32xf32> -> vector<2x32xf32>
    %69 = vector.broadcast %27 : vector<1x32xf32> to vector<2x32xf32>
    %70 = arith.addf %68, %69 : vector<2x32xf32>
    %71 = vector.extract_strided_slice %30 {offsets = [2, 0], sizes = [2, 32], strides = [1, 1]} : vector<16x32xf32> to vector<2x32xf32>
    %72 = arith.addf %71, %66 : vector<2x32xf32>
    %73 = arith.negf %72 : vector<2x32xf32>
    %74 = math.exp %73 : vector<2x32xf32>
    %cst_43 = arith.constant 1.000000e+00 : f32
    %75 = vector.broadcast %cst_43 : f32 to vector<2x32xf32>
    %76 = arith.addf %75, %74 : vector<2x32xf32>
    %77 = arith.divf %75, %76 : vector<2x32xf32>
    %78 = vector.extract_strided_slice %33 {offsets = [2, 0], sizes = [2, 32], strides = [1, 1]} : vector<16x32xf32> to vector<2x32xf32>
    %79 = arith.addf %78, %67 : vector<2x32xf32>
    %80 = arith.negf %79 : vector<2x32xf32>
    %81 = math.exp %80 : vector<2x32xf32>
    %cst_44 = arith.constant 1.000000e+00 : f32
    %82 = vector.broadcast %cst_44 : f32 to vector<2x32xf32>
    %83 = arith.addf %82, %81 : vector<2x32xf32>
    %84 = arith.divf %82, %83 : vector<2x32xf32>
    %85 = vector.extract_strided_slice %36 {offsets = [2, 0], sizes = [2, 32], strides = [1, 1]} : vector<16x32xf32> to vector<2x32xf32>
    %86 = arith.mulf %77, %70 : vector<2x32xf32>
    %87 = arith.addf %85, %86 : vector<2x32xf32>
    %88 = math.tanh %87 : vector<2x32xf32>
    %cst_45 = arith.constant 1.000000e+00 : f32
    %89 = vector.broadcast %cst_45 : f32 to vector<2x32xf32>
    %90 = arith.subf %89, %84 : vector<2x32xf32>
    %91 = arith.mulf %90, %88 : vector<2x32xf32>
    %92 = arith.mulf %84, %65 : vector<2x32xf32>
    %93 = arith.addf %91, %92 : vector<2x32xf32>
    %cst_46 = arith.constant dense<0.000000e+00> : vector<2x32xf32>
    %94 = tpu.matmul %93, %15, %cst_46 {dimension_numbers = #tpu.dot_dimension_numbers<[1], [0], [0], [1], [0, 0, 1, 1], [], []>} : vector<2x32xf32>, vector<32x32xf32>, vector<2x32xf32> -> vector<2x32xf32>
    %cst_47 = arith.constant dense<0.000000e+00> : vector<2x32xf32>
    %95 = tpu.matmul %93, %17, %cst_47 {dimension_numbers = #tpu.dot_dimension_numbers<[1], [0], [0], [1], [0, 0, 1, 1], [], []>} : vector<2x32xf32>, vector<32x32xf32>, vector<2x32xf32> -> vector<2x32xf32>
    %cst_48 = arith.constant dense<0.000000e+00> : vector<2x32xf32>
    %96 = tpu.matmul %93, %19, %cst_48 {dimension_numbers = #tpu.dot_dimension_numbers<[1], [0], [0], [1], [0, 0, 1, 1], [], []>} : vector<2x32xf32>, vector<32x32xf32>, vector<2x32xf32> -> vector<2x32xf32>
    %97 = vector.broadcast %27 : vector<1x32xf32> to vector<2x32xf32>
    %98 = arith.addf %96, %97 : vector<2x32xf32>
    %99 = vector.extract_strided_slice %30 {offsets = [4, 0], sizes = [2, 32], strides = [1, 1]} : vector<16x32xf32> to vector<2x32xf32>
    %100 = arith.addf %99, %94 : vector<2x32xf32>
    %101 = arith.negf %100 : vector<2x32xf32>
    %102 = math.exp %101 : vector<2x32xf32>
    %cst_49 = arith.constant 1.000000e+00 : f32
    %103 = vector.broadcast %cst_49 : f32 to vector<2x32xf32>
    %104 = arith.addf %103, %102 : vector<2x32xf32>
    %105 = arith.divf %103, %104 : vector<2x32xf32>
    %106 = vector.extract_strided_slice %33 {offsets = [4, 0], sizes = [2, 32], strides = [1, 1]} : vector<16x32xf32> to vector<2x32xf32>
    %107 = arith.addf %106, %95 : vector<2x32xf32>
    %108 = arith.negf %107 : vector<2x32xf32>
    %109 = math.exp %108 : vector<2x32xf32>
    %cst_50 = arith.constant 1.000000e+00 : f32
    %110 = vector.broadcast %cst_50 : f32 to vector<2x32xf32>
    %111 = arith.addf %110, %109 : vector<2x32xf32>
    %112 = arith.divf %110, %111 : vector<2x32xf32>
    %113 = vector.extract_strided_slice %36 {offsets = [4, 0], sizes = [2, 32], strides = [1, 1]} : vector<16x32xf32> to vector<2x32xf32>
    %114 = arith.mulf %105, %98 : vector<2x32xf32>
    %115 = arith.addf %113, %114 : vector<2x32xf32>
    %116 = math.tanh %115 : vector<2x32xf32>
    %cst_51 = arith.constant 1.000000e+00 : f32
    %117 = vector.broadcast %cst_51 : f32 to vector<2x32xf32>
    %118 = arith.subf %117, %112 : vector<2x32xf32>
    %119 = arith.mulf %118, %116 : vector<2x32xf32>
    %120 = arith.mulf %112, %93 : vector<2x32xf32>
    %121 = arith.addf %119, %120 : vector<2x32xf32>
    %cst_52 = arith.constant dense<0.000000e+00> : vector<2x32xf32>
    %122 = tpu.matmul %121, %15, %cst_52 {dimension_numbers = #tpu.dot_dimension_numbers<[1], [0], [0], [1], [0, 0, 1, 1], [], []>} : vector<2x32xf32>, vector<32x32xf32>, vector<2x32xf32> -> vector<2x32xf32>
    %cst_53 = arith.constant dense<0.000000e+00> : vector<2x32xf32>
    %123 = tpu.matmul %121, %17, %cst_53 {dimension_numbers = #tpu.dot_dimension_numbers<[1], [0], [0], [1], [0, 0, 1, 1], [], []>} : vector<2x32xf32>, vector<32x32xf32>, vector<2x32xf32> -> vector<2x32xf32>
    %cst_54 = arith.constant dense<0.000000e+00> : vector<2x32xf32>
    %124 = tpu.matmul %121, %19, %cst_54 {dimension_numbers = #tpu.dot_dimension_numbers<[1], [0], [0], [1], [0, 0, 1, 1], [], []>} : vector<2x32xf32>, vector<32x32xf32>, vector<2x32xf32> -> vector<2x32xf32>
    %125 = vector.broadcast %27 : vector<1x32xf32> to vector<2x32xf32>
    %126 = arith.addf %124, %125 : vector<2x32xf32>
    %127 = vector.extract_strided_slice %30 {offsets = [6, 0], sizes = [2, 32], strides = [1, 1]} : vector<16x32xf32> to vector<2x32xf32>
    %128 = arith.addf %127, %122 : vector<2x32xf32>
    %129 = arith.negf %128 : vector<2x32xf32>
    %130 = math.exp %129 : vector<2x32xf32>
    %cst_55 = arith.constant 1.000000e+00 : f32
    %131 = vector.broadcast %cst_55 : f32 to vector<2x32xf32>
    %132 = arith.addf %131, %130 : vector<2x32xf32>
    %133 = arith.divf %131, %132 : vector<2x32xf32>
    %134 = vector.extract_strided_slice %33 {offsets = [6, 0], sizes = [2, 32], strides = [1, 1]} : vector<16x32xf32> to vector<2x32xf32>
    %135 = arith.addf %134, %123 : vector<2x32xf32>
    %136 = arith.negf %135 : vector<2x32xf32>
    %137 = math.exp %136 : vector<2x32xf32>
    %cst_56 = arith.constant 1.000000e+00 : f32
    %138 = vector.broadcast %cst_56 : f32 to vector<2x32xf32>
    %139 = arith.addf %138, %137 : vector<2x32xf32>
    %140 = arith.divf %138, %139 : vector<2x32xf32>
    %141 = vector.extract_strided_slice %36 {offsets = [6, 0], sizes = [2, 32], strides = [1, 1]} : vector<16x32xf32> to vector<2x32xf32>
    %142 = arith.mulf %133, %126 : vector<2x32xf32>
    %143 = arith.addf %141, %142 : vector<2x32xf32>
    %144 = math.tanh %143 : vector<2x32xf32>
    %cst_57 = arith.constant 1.000000e+00 : f32
    %145 = vector.broadcast %cst_57 : f32 to vector<2x32xf32>
    %146 = arith.subf %145, %140 : vector<2x32xf32>
    %147 = arith.mulf %146, %144 : vector<2x32xf32>
    %148 = arith.mulf %140, %121 : vector<2x32xf32>
    %149 = arith.addf %147, %148 : vector<2x32xf32>
    %cst_58 = arith.constant dense<0.000000e+00> : vector<2x32xf32>
    %150 = tpu.matmul %149, %15, %cst_58 {dimension_numbers = #tpu.dot_dimension_numbers<[1], [0], [0], [1], [0, 0, 1, 1], [], []>} : vector<2x32xf32>, vector<32x32xf32>, vector<2x32xf32> -> vector<2x32xf32>
    %cst_59 = arith.constant dense<0.000000e+00> : vector<2x32xf32>
    %151 = tpu.matmul %149, %17, %cst_59 {dimension_numbers = #tpu.dot_dimension_numbers<[1], [0], [0], [1], [0, 0, 1, 1], [], []>} : vector<2x32xf32>, vector<32x32xf32>, vector<2x32xf32> -> vector<2x32xf32>
    %cst_60 = arith.constant dense<0.000000e+00> : vector<2x32xf32>
    %152 = tpu.matmul %149, %19, %cst_60 {dimension_numbers = #tpu.dot_dimension_numbers<[1], [0], [0], [1], [0, 0, 1, 1], [], []>} : vector<2x32xf32>, vector<32x32xf32>, vector<2x32xf32> -> vector<2x32xf32>
    %153 = vector.broadcast %27 : vector<1x32xf32> to vector<2x32xf32>
    %154 = arith.addf %152, %153 : vector<2x32xf32>
    %155 = vector.extract_strided_slice %30 {offsets = [8, 0], sizes = [2, 32], strides = [1, 1]} : vector<16x32xf32> to vector<2x32xf32>
    %156 = arith.addf %155, %150 : vector<2x32xf32>
    %157 = arith.negf %156 : vector<2x32xf32>
    %158 = math.exp %157 : vector<2x32xf32>
    %cst_61 = arith.constant 1.000000e+00 : f32
    %159 = vector.broadcast %cst_61 : f32 to vector<2x32xf32>
    %160 = arith.addf %159, %158 : vector<2x32xf32>
    %161 = arith.divf %159, %160 : vector<2x32xf32>
    %162 = vector.extract_strided_slice %33 {offsets = [8, 0], sizes = [2, 32], strides = [1, 1]} : vector<16x32xf32> to vector<2x32xf32>
    %163 = arith.addf %162, %151 : vector<2x32xf32>
    %164 = arith.negf %163 : vector<2x32xf32>
    %165 = math.exp %164 : vector<2x32xf32>
    %cst_62 = arith.constant 1.000000e+00 : f32
    %166 = vector.broadcast %cst_62 : f32 to vector<2x32xf32>
    %167 = arith.addf %166, %165 : vector<2x32xf32>
    %168 = arith.divf %166, %167 : vector<2x32xf32>
    %169 = vector.extract_strided_slice %36 {offsets = [8, 0], sizes = [2, 32], strides = [1, 1]} : vector<16x32xf32> to vector<2x32xf32>
    %170 = arith.mulf %161, %154 : vector<2x32xf32>
    %171 = arith.addf %169, %170 : vector<2x32xf32>
    %172 = math.tanh %171 : vector<2x32xf32>
    %cst_63 = arith.constant 1.000000e+00 : f32
    %173 = vector.broadcast %cst_63 : f32 to vector<2x32xf32>
    %174 = arith.subf %173, %168 : vector<2x32xf32>
    %175 = arith.mulf %174, %172 : vector<2x32xf32>
    %176 = arith.mulf %168, %149 : vector<2x32xf32>
    %177 = arith.addf %175, %176 : vector<2x32xf32>
    %cst_64 = arith.constant dense<0.000000e+00> : vector<2x32xf32>
    %178 = tpu.matmul %177, %15, %cst_64 {dimension_numbers = #tpu.dot_dimension_numbers<[1], [0], [0], [1], [0, 0, 1, 1], [], []>} : vector<2x32xf32>, vector<32x32xf32>, vector<2x32xf32> -> vector<2x32xf32>
    %cst_65 = arith.constant dense<0.000000e+00> : vector<2x32xf32>
    %179 = tpu.matmul %177, %17, %cst_65 {dimension_numbers = #tpu.dot_dimension_numbers<[1], [0], [0], [1], [0, 0, 1, 1], [], []>} : vector<2x32xf32>, vector<32x32xf32>, vector<2x32xf32> -> vector<2x32xf32>
    %cst_66 = arith.constant dense<0.000000e+00> : vector<2x32xf32>
    %180 = tpu.matmul %177, %19, %cst_66 {dimension_numbers = #tpu.dot_dimension_numbers<[1], [0], [0], [1], [0, 0, 1, 1], [], []>} : vector<2x32xf32>, vector<32x32xf32>, vector<2x32xf32> -> vector<2x32xf32>
    %181 = vector.broadcast %27 : vector<1x32xf32> to vector<2x32xf32>
    %182 = arith.addf %180, %181 : vector<2x32xf32>
    %183 = vector.extract_strided_slice %30 {offsets = [10, 0], sizes = [2, 32], strides = [1, 1]} : vector<16x32xf32> to vector<2x32xf32>
    %184 = arith.addf %183, %178 : vector<2x32xf32>
    %185 = arith.negf %184 : vector<2x32xf32>
    %186 = math.exp %185 : vector<2x32xf32>
    %cst_67 = arith.constant 1.000000e+00 : f32
    %187 = vector.broadcast %cst_67 : f32 to vector<2x32xf32>
    %188 = arith.addf %187, %186 : vector<2x32xf32>
    %189 = arith.divf %187, %188 : vector<2x32xf32>
    %190 = vector.extract_strided_slice %33 {offsets = [10, 0], sizes = [2, 32], strides = [1, 1]} : vector<16x32xf32> to vector<2x32xf32>
    %191 = arith.addf %190, %179 : vector<2x32xf32>
    %192 = arith.negf %191 : vector<2x32xf32>
    %193 = math.exp %192 : vector<2x32xf32>
    %cst_68 = arith.constant 1.000000e+00 : f32
    %194 = vector.broadcast %cst_68 : f32 to vector<2x32xf32>
    %195 = arith.addf %194, %193 : vector<2x32xf32>
    %196 = arith.divf %194, %195 : vector<2x32xf32>
    %197 = vector.extract_strided_slice %36 {offsets = [10, 0], sizes = [2, 32], strides = [1, 1]} : vector<16x32xf32> to vector<2x32xf32>
    %198 = arith.mulf %189, %182 : vector<2x32xf32>
    %199 = arith.addf %197, %198 : vector<2x32xf32>
    %200 = math.tanh %199 : vector<2x32xf32>
    %cst_69 = arith.constant 1.000000e+00 : f32
    %201 = vector.broadcast %cst_69 : f32 to vector<2x32xf32>
    %202 = arith.subf %201, %196 : vector<2x32xf32>
    %203 = arith.mulf %202, %200 : vector<2x32xf32>
    %204 = arith.mulf %196, %177 : vector<2x32xf32>
    %205 = arith.addf %203, %204 : vector<2x32xf32>
    %cst_70 = arith.constant dense<0.000000e+00> : vector<2x32xf32>
    %206 = tpu.matmul %205, %15, %cst_70 {dimension_numbers = #tpu.dot_dimension_numbers<[1], [0], [0], [1], [0, 0, 1, 1], [], []>} : vector<2x32xf32>, vector<32x32xf32>, vector<2x32xf32> -> vector<2x32xf32>
    %cst_71 = arith.constant dense<0.000000e+00> : vector<2x32xf32>
    %207 = tpu.matmul %205, %17, %cst_71 {dimension_numbers = #tpu.dot_dimension_numbers<[1], [0], [0], [1], [0, 0, 1, 1], [], []>} : vector<2x32xf32>, vector<32x32xf32>, vector<2x32xf32> -> vector<2x32xf32>
    %cst_72 = arith.constant dense<0.000000e+00> : vector<2x32xf32>
    %208 = tpu.matmul %205, %19, %cst_72 {dimension_numbers = #tpu.dot_dimension_numbers<[1], [0], [0], [1], [0, 0, 1, 1], [], []>} : vector<2x32xf32>, vector<32x32xf32>, vector<2x32xf32> -> vector<2x32xf32>
    %209 = vector.broadcast %27 : vector<1x32xf32> to vector<2x32xf32>
    %210 = arith.addf %208, %209 : vector<2x32xf32>
    %211 = vector.extract_strided_slice %30 {offsets = [12, 0], sizes = [2, 32], strides = [1, 1]} : vector<16x32xf32> to vector<2x32xf32>
    %212 = arith.addf %211, %206 : vector<2x32xf32>
    %213 = arith.negf %212 : vector<2x32xf32>
    %214 = math.exp %213 : vector<2x32xf32>
    %cst_73 = arith.constant 1.000000e+00 : f32
    %215 = vector.broadcast %cst_73 : f32 to vector<2x32xf32>
    %216 = arith.addf %215, %214 : vector<2x32xf32>
    %217 = arith.divf %215, %216 : vector<2x32xf32>
    %218 = vector.extract_strided_slice %33 {offsets = [12, 0], sizes = [2, 32], strides = [1, 1]} : vector<16x32xf32> to vector<2x32xf32>
    %219 = arith.addf %218, %207 : vector<2x32xf32>
    %220 = arith.negf %219 : vector<2x32xf32>
    %221 = math.exp %220 : vector<2x32xf32>
    %cst_74 = arith.constant 1.000000e+00 : f32
    %222 = vector.broadcast %cst_74 : f32 to vector<2x32xf32>
    %223 = arith.addf %222, %221 : vector<2x32xf32>
    %224 = arith.divf %222, %223 : vector<2x32xf32>
    %225 = vector.extract_strided_slice %36 {offsets = [12, 0], sizes = [2, 32], strides = [1, 1]} : vector<16x32xf32> to vector<2x32xf32>
    %226 = arith.mulf %217, %210 : vector<2x32xf32>
    %227 = arith.addf %225, %226 : vector<2x32xf32>
    %228 = math.tanh %227 : vector<2x32xf32>
    %cst_75 = arith.constant 1.000000e+00 : f32
    %229 = vector.broadcast %cst_75 : f32 to vector<2x32xf32>
    %230 = arith.subf %229, %224 : vector<2x32xf32>
    %231 = arith.mulf %230, %228 : vector<2x32xf32>
    %232 = arith.mulf %224, %205 : vector<2x32xf32>
    %233 = arith.addf %231, %232 : vector<2x32xf32>
    %cst_76 = arith.constant dense<0.000000e+00> : vector<2x32xf32>
    %234 = tpu.matmul %233, %15, %cst_76 {dimension_numbers = #tpu.dot_dimension_numbers<[1], [0], [0], [1], [0, 0, 1, 1], [], []>} : vector<2x32xf32>, vector<32x32xf32>, vector<2x32xf32> -> vector<2x32xf32>
    %cst_77 = arith.constant dense<0.000000e+00> : vector<2x32xf32>
    %235 = tpu.matmul %233, %17, %cst_77 {dimension_numbers = #tpu.dot_dimension_numbers<[1], [0], [0], [1], [0, 0, 1, 1], [], []>} : vector<2x32xf32>, vector<32x32xf32>, vector<2x32xf32> -> vector<2x32xf32>
    %cst_78 = arith.constant dense<0.000000e+00> : vector<2x32xf32>
    %236 = tpu.matmul %233, %19, %cst_78 {dimension_numbers = #tpu.dot_dimension_numbers<[1], [0], [0], [1], [0, 0, 1, 1], [], []>} : vector<2x32xf32>, vector<32x32xf32>, vector<2x32xf32> -> vector<2x32xf32>
    %237 = vector.broadcast %27 : vector<1x32xf32> to vector<2x32xf32>
    %238 = arith.addf %236, %237 : vector<2x32xf32>
    %239 = vector.extract_strided_slice %30 {offsets = [14, 0], sizes = [2, 32], strides = [1, 1]} : vector<16x32xf32> to vector<2x32xf32>
    %240 = arith.addf %239, %234 : vector<2x32xf32>
    %241 = arith.negf %240 : vector<2x32xf32>
    %242 = math.exp %241 : vector<2x32xf32>
    %cst_79 = arith.constant 1.000000e+00 : f32
    %243 = vector.broadcast %cst_79 : f32 to vector<2x32xf32>
    %244 = arith.addf %243, %242 : vector<2x32xf32>
    %245 = arith.divf %243, %244 : vector<2x32xf32>
    %246 = vector.extract_strided_slice %33 {offsets = [14, 0], sizes = [2, 32], strides = [1, 1]} : vector<16x32xf32> to vector<2x32xf32>
    %247 = arith.addf %246, %235 : vector<2x32xf32>
    %248 = arith.negf %247 : vector<2x32xf32>
    %249 = math.exp %248 : vector<2x32xf32>
    %cst_80 = arith.constant 1.000000e+00 : f32
    %250 = vector.broadcast %cst_80 : f32 to vector<2x32xf32>
    %251 = arith.addf %250, %249 : vector<2x32xf32>
    %252 = arith.divf %250, %251 : vector<2x32xf32>
    %253 = vector.extract_strided_slice %36 {offsets = [14, 0], sizes = [2, 32], strides = [1, 1]} : vector<16x32xf32> to vector<2x32xf32>
    %254 = arith.mulf %245, %238 : vector<2x32xf32>
    %255 = arith.addf %253, %254 : vector<2x32xf32>
    %256 = math.tanh %255 : vector<2x32xf32>
    %cst_81 = arith.constant 1.000000e+00 : f32
    %257 = vector.broadcast %cst_81 : f32 to vector<2x32xf32>
    %258 = arith.subf %257, %252 : vector<2x32xf32>
    %259 = arith.mulf %258, %256 : vector<2x32xf32>
    %260 = arith.mulf %252, %233 : vector<2x32xf32>
    %261 = arith.addf %259, %260 : vector<2x32xf32>
    %262 = arith.mulf %261, %261 : vector<2x32xf32>
    %cst_82 = arith.constant dense<0.000000e+00> : vector<2xf32>
    %263 = vector.multi_reduction <add>, %262, %cst_82 [1] : vector<2x32xf32> to vector<2xf32>
    %264 = vector.shape_cast %263 : vector<2xf32> to vector<2x1xf32>
    %cst_83 = arith.constant 9.99999996E-13 : f32
    %265 = vector.broadcast %cst_83 : f32 to vector<2x1xf32>
    %266 = arith.addf %264, %265 : vector<2x1xf32>
    %267 = math.rsqrt %266 : vector<2x1xf32>
    %268 = vector.broadcast %267 : vector<2x1xf32> to vector<2x32xf32>
    %269 = arith.mulf %261, %268 : vector<2x32xf32>
    %c0_84 = arith.constant 0 : index
    %c0_85 = arith.constant 0 : index
    %270 = vector.load %arg5[%c0_84, %c0_85] : memref<32x4xf32, #tpu.memory_space<vmem>>, vector<32x4xf32>
    %cst_86 = arith.constant dense<0.000000e+00> : vector<2x4xf32>
    %271 = tpu.matmul %269, %270, %cst_86 {dimension_numbers = #tpu.dot_dimension_numbers<[1], [0], [0], [1], [0, 0, 1, 1], [], []>} : vector<2x32xf32>, vector<32x4xf32>, vector<2x4xf32> -> vector<2x4xf32>
    %c0_87 = arith.constant 0 : index
    %c0_88 = arith.constant 0 : index
    %272 = vector.load %arg6[%c0_87, %c0_88] : memref<1x4xf32, #tpu.memory_space<vmem>>, vector<1x4xf32>
    %273 = vector.broadcast %272 : vector<1x4xf32> to vector<2x4xf32>
    %274 = arith.addf %271, %273 : vector<2x4xf32>
    %c0_89 = arith.constant 0 : index
    %c0_90 = arith.constant 0 : index
    %275 = memref.load %arg7[%c0_89, %c0_90] : memref<1x1xf32, #tpu.memory_space<smem>>
    %cst_91 = arith.constant 0.000000e+00 : f32
    %276 = vector.broadcast %cst_91 : f32 to vector<2x4xf32>
    %277 = arith.cmpf oge, %274, %276 : vector<2x4xf32>
    %278 = vector.broadcast %275 : f32 to vector<2x4xf32>
    %279 = arith.mulf %274, %278 : vector<2x4xf32>
    %280 = arith.select %277, %274, %279 : vector<2x4xi1>, vector<2x4xf32>
    %c0_92 = arith.constant 0 : index
    %c0_93 = arith.constant 0 : index
    %281 = vector.load %arg8[%c0_92, %c0_93] : memref<2x4xf32, #tpu.memory_space<vmem>>, vector<2x4xf32>
    tpu.vector_store %arg8[%c0_92, %c0_93], %280 {strides = array<i32>} : memref<2x4xf32, #tpu.memory_space<vmem>>, vector<2x4xf32>,
    return
  }
}

</mosaic_0001>

<llo_original>
// kernel: model_forward.1
$region0: #{model_forward.1}
  #allocation0 [shape = 'u32[]', space=smem, size = 0x4, offset = 0x4, fixed_abs, tag = 'smem constant byte address 0x4 - core index']
  #allocation1 [shape = 'u32[72,128]{1,0:T(1,128)}', space=vmem, size = 0x9000, scoped, tag = 'internal scratch']
  #allocation2 [shape = 'f32[1,1]{1,0:T(1,128)S(6)}', space=smem, size = 0x200, scoped, tag = 'scoped memory for model_forward.1']
  %s0 = inlined_call_operand.vmem [shape: s32[16,1], index: 0, kind: input, shape index: {}]
  %s1 = inlined_call_operand.vmem [shape: f32[16,32], index: 1, kind: input, shape index: {}]
  %s2 = inlined_call_operand.hbm [shape: f32[3,32,32], index: 2, kind: input, shape index: {}]
  %s3 = inlined_call_operand.hbm [shape: f32[3,32,32], index: 3, kind: input, shape index: {}]
  %s4 = inlined_call_operand.vmem [shape: f32[4,1,32], index: 4, kind: input, shape index: {}]
  %s5 = inlined_call_operand.vmem [shape: f32[32,4], index: 5, kind: input, shape index: {}]
  %s6 = inlined_call_operand.vmem [shape: f32[1,4], index: 6, kind: input, shape index: {}]
  %s7 = inlined_call_operand.<no memory space> [shape: f32[1,1], index: 7, kind: input, shape index: {}]
  %s8 = inlined_call_operand.hbm [shape: f32[2,4], index: 8, kind: output, shape index: {}]
  %s9 = sld [smem:[#allocation0]]
  $region50: #{model_forward.1} parent=0
    _
  %s11 = ssub.s32 1, %s9
  %s12 = scalar_select 0, %s11, %s9
  %13 = sst [smem:[#allocation2]] %s7
  $region1: #{model_forward.1} parent=0
    #allocation3 [shape = 'u8[49152]{0}', space=vmem, size = 0xc000, scoped, tag = 'input window, operand 2, single buffered']
    #allocation4 [shape = 's32[1]{0}', space=sflag, size = 0x4, scoped, tag = 'scoped memory for model_forward.1']
    #allocation5 [shape = 's32[1]{0}', space=sflag, size = 0x4, scoped, tag = 'scoped memory for model_forward.1']
    #allocation6 [shape = 'u8[49152]{0}', space=vmem, size = 0xc000, scoped, tag = 'input window, operand 3, single buffered']
    #allocation7 [shape = 's32[1]{0}', space=sflag, size = 0x4, scoped, tag = 'scoped memory for model_forward.1']
    #allocation8 [shape = 'u8[1024]{0}', space=vmem, size = 0x400, scoped, tag = 'output window, operand 0, single buffered']
    %14 = vsyncpa [#allocation4], 0
    %15 = vsyncpa [#allocation7], 0
    %16 = vsyncpa [#allocation5], 0
    // Predicated region
    $region2: #{model_forward.1} parent=1 // pred_check
      _
    $region3: #{model_forward.1} parent=1 // pred_check_branch
      %18 = sbr.rel (0) target = $region5
    $region4: #{model_forward.1} parent=1 // pred_region
      _
    $region5: #{model_forward.1} parent=1 // pred_fallthru
      _
    // Predicated region
    $region6: #{model_forward.1} parent=1 // pred_check
      _
    $region7: #{model_forward.1} parent=1 // pred_check_branch
      %20 = sbr.rel (0) target = $region9
    $region8: #{model_forward.1} parent=1 // pred_region
      _
    $region9: #{model_forward.1} parent=1 // pred_fallthru
      _
    // Predicated region
    $region10: #{model_forward.1} parent=1 // pred_check
      _
    $region11: #{model_forward.1} parent=1 // pred_check_branch
      %22 = sbr.rel (0) target = $region13
    $region12: #{model_forward.1} parent=1 // pred_region
      %24 = vsyncadd [#allocation4], 0
      %s25 = sshll.u32 %s2, 4
      %s26 = int_to_ptr.hbm [resolvable:$true] %s25
      %s27 = sshll.u32 [#allocation3], 4
      %s28 = int_to_ptr.vmem [resolvable:$true] %s27
      %33 = dma.hbm_to_vmem [thread:$0]  %s26, 1536, %s28, [#allocation4], 128, 128, 8
    $region13: #{model_forward.1} parent=1 // pred_fallthru
      _
    // Predicated region
    $region14: #{model_forward.1} parent=1 // pred_check
      _
    $region15: #{model_forward.1} parent=1 // pred_check_branch
      %35 = sbr.rel (0) target = $region17
    $region16: #{model_forward.1} parent=1 // pred_region
      %37 = vsyncadd [#allocation7], 0
      %s38 = sshll.u32 %s3, 4
      %s39 = int_to_ptr.hbm [resolvable:$true] %s38
      %s40 = sshll.u32 [#allocation6], 4
      %s41 = int_to_ptr.vmem [resolvable:$true] %s40
      %46 = dma.hbm_to_vmem [thread:$0]  %s39, 1536, %s41, [#allocation7], 128, 128, 8
    $region17: #{model_forward.1} parent=1 // pred_fallthru
      _
    // Predicated region
    $region18: #{model_forward.1} parent=1 // pred_check
      _
    $region19: #{model_forward.1} parent=1 // pred_check_branch
      %48 = sbr.rel (0) target = $region21
    $region20: #{model_forward.1} parent=1 // pred_region
      _
    $region21: #{model_forward.1} parent=1 // pred_fallthru
      _
    // Predicated region
    $region22: #{model_forward.1} parent=1 // pred_check
      _
    $region23: #{model_forward.1} parent=1 // pred_check_branch
      %50 = sbr.rel (0) target = $region25
    $region24: #{model_forward.1} parent=1 // pred_region
      _
    $region25: #{model_forward.1} parent=1 // pred_fallthru
      _
    // Predicated region
    $region26: #{model_forward.1} parent=1 // pred_check
      _
    $region27: #{model_forward.1} parent=1 // pred_check_branch
      %52 = sbr.rel (0) target = $region29
    $region28: #{model_forward.1} parent=1 // pred_region
      _
    $region29: #{model_forward.1} parent=1 // pred_fallthru
      _
    // Predicated region
    $region30: #{model_forward.1} parent=1 // pred_check
      _
    $region31: #{model_forward.1} parent=1 // pred_check_branch
      %54 = sbr.rel (0) target = $region33
    $region32: #{model_forward.1} parent=1 // pred_region
      _
    $region33: #{model_forward.1} parent=1 // pred_fallthru
      _
    // Predicated region
    $region34: #{model_forward.1} parent=1 // pred_check
      _
    $region35: #{model_forward.1} parent=1 // pred_check_branch
      %56 = sbr.rel (0) target = $region37
    $region36: #{model_forward.1} parent=1 // pred_region
      %58 = dma.done [#allocation4], 1536
    $region37: #{model_forward.1} parent=1 // pred_fallthru
      _
    // Predicated region
    $region38: #{model_forward.1} parent=1 // pred_check
      _
    $region39: #{model_forward.1} parent=1 // pred_check_branch
      %60 = sbr.rel (0) target = $region41
    $region40: #{model_forward.1} parent=1 // pred_region
      %62 = dma.done [#allocation7], 1536
    $region41: #{model_forward.1} parent=1 // pred_fallthru
      _
    %v63 = vld [vmem:[%s0] sm:$0xff]
    %v64 = vld [vmem:[%s0 + $0x8] sm:$0xff]
    %v65 = vlaneseq
    %v66 = vand.u32 %v65, 127
    %67 = vset.pattern.permute.xlu0 0
    %68 = vperm.xlu0 %67, %v63
    %v69 = vpop.permute.xlu0 %68
    %70 = vset.pattern.permute.xlu0 0
    %71 = vperm.xlu0 %70, %v64
    %v72 = vpop.permute.xlu0 %71
    %vm73 = vcmp.eq.s32.totalorder %v69, %v66
    %vm74 = vcmp.eq.s32.totalorder %v72, %v66
    %v75 = vsel %vm73, 1, 0
    %v76 = vsel %vm74, 1, 0
    %v77 = vcvt.s32.f32 %v75
    %v78 = vcvt.s32.f32 %v76
    %v79 = vld [vmem:[%s1] sm:$0xff]
    %v80 = vld [vmem:[%s1 + $0x8] sm:$0xff]
    %vm81 = vcmask 130048
    %v83 = vsel %vm81, %v77, 0
    %v86 = vsel %vm81, %v78, 0
    %88 = vmatpush.msra.mxu0 0.0
    %89 = vmatpush.msra.mxu0 0.0
    %90 = vmatpush.msra.mxu0 0.0
    %91 = vmatpush.msra.mxu0 0.0
    %92 = vmatpush.msra.mxu0 0.0
    %93 = vmatpush.msra.mxu0 0.0
    %94 = vmatpush.msra.mxu0 0.0
    %95 = vmatpush.msra.mxu0 0.0
    %96 = vmatpush.msra.mxu0 0.0
    %97 = vmatpush.msra.mxu0 0.0
    %98 = vmatpush.msra.mxu0 0.0
    %99 = vmatpush.msra.mxu0 0.0
    %100 = vmatpush.msra.mxu0 0.0
    %101 = vmatpush.msra.mxu0 0.0
    %102 = vmatpush.msra.mxu0 %v80
    %103 = vmatpush.msra.mxu0 %v79
    %104 = vmatmul.f32.gmra.mxu0 %v83
    %v105 = vpop.f32.mrf.mxu0
    %v106 = vadd.f32 0.0, %v105
    %107 = vmatmul.f32.gmra.mxu0 %v86
    %v108 = vpop.f32.mrf.mxu0
    %v109 = vadd.f32 0.0, %v108
    %110 = vdwg.mxu0
    %v111 = vld [vmem:[#allocation3] sm:$0xff]
    %v112 = vld [vmem:[#allocation3 + $0x8] sm:$0xff]
    %v113 = vld [vmem:[#allocation3 + $0x10] sm:$0xff]
    %v114 = vld [vmem:[#allocation3 + $0x18] sm:$0xff]
    %s115 = scalar_lea.vmem [#allocation3], 32
    %v116 = vld [vmem:[%s115] sm:$0xff]
    %v117 = vld [vmem:[%s115 + $0x8] sm:$0xff]
    %v118 = vld [vmem:[%s115 + $0x10] sm:$0xff]
    %v119 = vld [vmem:[%s115 + $0x18] sm:$0xff]
    %s120 = scalar_lea.vmem [#allocation3], 64
    %v121 = vld [vmem:[%s120] sm:$0xff]
    %v122 = vld [vmem:[%s120 + $0x8] sm:$0xff]
    %v123 = vld [vmem:[%s120 + $0x10] sm:$0xff]
    %v124 = vld [vmem:[%s120 + $0x18] sm:$0xff]
    %v125 = vld [vmem:[#allocation6] sm:$0xff]
    %v126 = vld [vmem:[#allocation6 + $0x8] sm:$0xff]
    %v127 = vld [vmem:[#allocation6 + $0x10] sm:$0xff]
    %v128 = vld [vmem:[#allocation6 + $0x18] sm:$0xff]
    %s129 = scalar_lea.vmem [#allocation6], 32
    %v130 = vld [vmem:[%s129] sm:$0xff]
    %v131 = vld [vmem:[%s129 + $0x8] sm:$0xff]
    %v132 = vld [vmem:[%s129 + $0x10] sm:$0xff]
    %v133 = vld [vmem:[%s129 + $0x18] sm:$0xff]
    %s134 = scalar_lea.vmem [#allocation6], 64
    %v135 = vld [vmem:[%s134] sm:$0xff]
    %v136 = vld [vmem:[%s134 + $0x8] sm:$0xff]
    %v137 = vld [vmem:[%s134 + $0x10] sm:$0xff]
    %v138 = vld [vmem:[%s134 + $0x18] sm:$0xff]
    %v139 = vld [vmem:[%s4] sm:$0x1]
    %s140 = scalar_lea.vmem %s4, 1
    %v141 = vld [vmem:[%s140] sm:$0x1]
    %s142 = scalar_lea.vmem %s4, 2
    %v143 = vld [vmem:[%s142] sm:$0x1]
    %s144 = scalar_lea.vmem %s4, 3
    %v145 = vld [vmem:[%s144] sm:$0x1]
    %v147 = vperm.slane %v139, 0
    %vm149 = vcmask 261120
    %v151 = vsel %vm149, %v106, 0
    %v154 = vsel %vm149, %v109, 0
    %156 = vmatpush.msra.mxu0 0.0
    %157 = vmatpush.msra.mxu0 0.0
    %158 = vmatpush.msra.mxu0 0.0
    %159 = vmatpush.msra.mxu0 0.0
    %160 = vmatpush.msra.mxu0 0.0
    %161 = vmatpush.msra.mxu0 0.0
    %162 = vmatpush.msra.mxu0 0.0
    %163 = vmatpush.msra.mxu0 0.0
    %164 = vmatpush.msra.mxu0 0.0
    %165 = vmatpush.msra.mxu0 0.0
    %166 = vmatpush.msra.mxu0 0.0
    %167 = vmatpush.msra.mxu0 0.0
    %168 = vmatpush.msra.mxu0 %v114
    %169 = vmatpush.msra.mxu0 %v113
    %170 = vmatpush.msra.mxu0 %v112
    %171 = vmatpush.msra.mxu0 %v111
    %172 = vmatmul.f32.gmra.mxu0 %v151
    %v173 = vpop.f32.mrf.mxu0
    %v174 = vadd.f32 %v147, %v173
    %175 = vmatmul.f32.gmra.mxu0 %v154
    %v176 = vpop.f32.mrf.mxu0
    %v177 = vadd.f32 %v147, %v176
    %178 = vdwg.mxu0
    %v180 = vperm.slane %v141, 0
    %182 = vmatpush.msra.mxu0 0.0
    %183 = vmatpush.msra.mxu0 0.0
    %184 = vmatpush.msra.mxu0 0.0
    %185 = vmatpush.msra.mxu0 0.0
    %186 = vmatpush.msra.mxu0 0.0
    %187 = vmatpush.msra.mxu0 0.0
    %188 = vmatpush.msra.mxu0 0.0
    %189 = vmatpush.msra.mxu0 0.0
    %190 = vmatpush.msra.mxu0 0.0
    %191 = vmatpush.msra.mxu0 0.0
    %192 = vmatpush.msra.mxu0 0.0
    %193 = vmatpush.msra.mxu0 0.0
    %194 = vmatpush.msra.mxu0 %v119
    %195 = vmatpush.msra.mxu0 %v118
    %196 = vmatpush.msra.mxu0 %v117
    %197 = vmatpush.msra.mxu0 %v116
    %198 = vmatmul.f32.gmra.mxu0 %v151
    %v199 = vpop.f32.mrf.mxu0
    %v200 = vadd.f32 %v180, %v199
    %201 = vmatmul.f32.gmra.mxu0 %v154
    %v202 = vpop.f32.mrf.mxu0
    %v203 = vadd.f32 %v180, %v202
    %204 = vdwg.mxu0
    %v206 = vperm.slane %v143, 0
    %208 = vmatpush.msra.mxu0 0.0
    %209 = vmatpush.msra.mxu0 0.0
    %210 = vmatpush.msra.mxu0 0.0
    %211 = vmatpush.msra.mxu0 0.0
    %212 = vmatpush.msra.mxu0 0.0
    %213 = vmatpush.msra.mxu0 0.0
    %214 = vmatpush.msra.mxu0 0.0
    %215 = vmatpush.msra.mxu0 0.0
    %216 = vmatpush.msra.mxu0 0.0
    %217 = vmatpush.msra.mxu0 0.0
    %218 = vmatpush.msra.mxu0 0.0
    %219 = vmatpush.msra.mxu0 0.0
    %220 = vmatpush.msra.mxu0 %v124
    %221 = vmatpush.msra.mxu0 %v123
    %222 = vmatpush.msra.mxu0 %v122
    %223 = vmatpush.msra.mxu0 %v121
    %224 = vmatmul.f32.gmra.mxu0 %v151
    %v225 = vpop.f32.mrf.mxu0
    %v226 = vadd.f32 %v206, %v225
    %227 = vmatmul.f32.gmra.mxu0 %v154
    %v228 = vpop.f32.mrf.mxu0
    %v229 = vadd.f32 %v206, %v228
    %230 = vdwg.mxu0
    %v232 = vsel %vm149, 0.0, 0
    %234 = vmatpush.msra.mxu0 0.0
    %235 = vmatpush.msra.mxu0 0.0
    %236 = vmatpush.msra.mxu0 0.0
    %237 = vmatpush.msra.mxu0 0.0
    %238 = vmatpush.msra.mxu0 0.0
    %239 = vmatpush.msra.mxu0 0.0
    %240 = vmatpush.msra.mxu0 0.0
    %241 = vmatpush.msra.mxu0 0.0
    %242 = vmatpush.msra.mxu0 0.0
    %243 = vmatpush.msra.mxu0 0.0
    %244 = vmatpush.msra.mxu0 0.0
    %245 = vmatpush.msra.mxu0 0.0
    %246 = vmatpush.msra.mxu0 %v128
    %247 = vmatpush.msra.mxu0 %v127
    %248 = vmatpush.msra.mxu0 %v126
    %249 = vmatpush.msra.mxu0 %v125
    %250 = vmatmul.f32.gmra.mxu0 %v232
    %v251 = vpop.f32.mrf.mxu0
    %v252 = vadd.f32 0.0, %v251
    %253 = vdwg.mxu0
    %254 = vmatpush.msra.mxu0 0.0
    %255 = vmatpush.msra.mxu0 0.0
    %256 = vmatpush.msra.mxu0 0.0
    %257 = vmatpush.msra.mxu0 0.0
    %258 = vmatpush.msra.mxu0 0.0
    %259 = vmatpush.msra.mxu0 0.0
    %260 = vmatpush.msra.mxu0 0.0
    %261 = vmatpush.msra.mxu0 0.0
    %262 = vmatpush.msra.mxu0 0.0
    %263 = vmatpush.msra.mxu0 0.0
    %264 = vmatpush.msra.mxu0 0.0
    %265 = vmatpush.msra.mxu0 0.0
    %266 = vmatpush.msra.mxu0 %v133
    %267 = vmatpush.msra.mxu0 %v132
    %268 = vmatpush.msra.mxu0 %v131
    %269 = vmatpush.msra.mxu0 %v130
    %270 = vmatmul.f32.gmra.mxu0 %v232
    %v271 = vpop.f32.mrf.mxu0
    %v272 = vadd.f32 0.0, %v271
    %273 = vdwg.mxu0
    %v275 = vperm.slane %v145, 0
    %277 = vmatpush.msra.mxu0 0.0
    %278 = vmatpush.msra.mxu0 0.0
    %279 = vmatpush.msra.mxu0 0.0
    %280 = vmatpush.msra.mxu0 0.0
    %281 = vmatpush.msra.mxu0 0.0
    %282 = vmatpush.msra.mxu0 0.0
    %283 = vmatpush.msra.mxu0 0.0
    %284 = vmatpush.msra.mxu0 0.0
    %285 = vmatpush.msra.mxu0 0.0
    %286 = vmatpush.msra.mxu0 0.0
    %287 = vmatpush.msra.mxu0 0.0
    %288 = vmatpush.msra.mxu0 0.0
    %289 = vmatpush.msra.mxu0 %v138
    %290 = vmatpush.msra.mxu0 %v137
    %291 = vmatpush.msra.mxu0 %v136
    %292 = vmatpush.msra.mxu0 %v135
    %293 = vmatmul.f32.gmra.mxu0 %v232
    %v294 = vpop.f32.mrf.mxu0
    %v295 = vadd.f32 %v275, %v294
    %296 = vdwg.mxu0
    %v297 = vadd.f32 %v174, %v252
    %v298 = vxor.u32 %v297, 2147483648
    %v299 = vmul.f32 %v298, 1.442695
    %v300 = vpow.pop %v299
    %v301 = vadd.f32 %v300, 1.0
    %v302 = vrcp.pop %v301
    %v303 = vmul.f32 %v301, %v302
    %v304 = vsub.f32 1.0, %v303
    %v305 = vmul.f32 %v302, %v304
    %v306 = vadd.f32 %v302, %v305
    %vm307 = vweird.f32 %v301
    %vm308 = vweird.f32 %v302
    %vm309 = vmor %vm307, %vm308
    %v310 = vsel %vm309, %v302, %v306
    %v311 = vand.u32 2147483647, %v301
    %vm312 = vcmp.eq.f32.partialorder %v311, 8.507059e+37
    %v313 = vand.u32 %v301, 2147483648
    %v314 = vor.u32 1.1754944e-38, %v313
    %v315 = vsel %vm312, %v314, %v310
    %v316 = vmul.f32 1.0, %v315
    %v317 = vadd.f32 %v200, %v272
    %v318 = vxor.u32 %v317, 2147483648
    %v319 = vmul.f32 %v318, 1.442695
    %v320 = vpow.pop %v319
    %v321 = vadd.f32 %v320, 1.0
    %v322 = vrcp.pop %v321
    %v323 = vmul.f32 %v321, %v322
    %v324 = vsub.f32 1.0, %v323
    %v325 = vmul.f32 %v322, %v324
    %v326 = vadd.f32 %v322, %v325
    %vm327 = vweird.f32 %v321
    %vm328 = vweird.f32 %v322
    %vm329 = vmor %vm327, %vm328
    %v330 = vsel %vm329, %v322, %v326
    %v331 = vand.u32 2147483647, %v321
    %vm332 = vcmp.eq.f32.partialorder %v331, 8.507059e+37
    %v333 = vand.u32 %v321, 2147483648
    %v334 = vor.u32 1.1754944e-38, %v333
    %v335 = vsel %vm332, %v334, %v330
    %v336 = vmul.f32 1.0, %v335
    %v337 = vmul.f32 %v316, %v295
    %v338 = vadd.f32 %v226, %v337
    %v339 = vtanh.pop %v338
    %v340 = vsub.f32 1.0, %v336
    %v341 = vmul.f32 %v340, %v339
    %v342 = vmul.f32 %v336, 0.0
    %v343 = vadd.f32 %v341, %v342
    %v345 = vsel %vm149, %v343, 0
    %347 = vmatpush.msra.mxu0 0.0
    %348 = vmatpush.msra.mxu0 0.0
    %349 = vmatpush.msra.mxu0 0.0
    %350 = vmatpush.msra.mxu0 0.0
    %351 = vmatpush.msra.mxu0 0.0
    %352 = vmatpush.msra.mxu0 0.0
    %353 = vmatpush.msra.mxu0 0.0
    %354 = vmatpush.msra.mxu0 0.0
    %355 = vmatpush.msra.mxu0 0.0
    %356 = vmatpush.msra.mxu0 0.0
    %357 = vmatpush.msra.mxu0 0.0
    %358 = vmatpush.msra.mxu0 0.0
    %359 = vmatpush.msra.mxu0 %v128
    %360 = vmatpush.msra.mxu0 %v127
    %361 = vmatpush.msra.mxu0 %v126
    %362 = vmatpush.msra.mxu0 %v125
    %363 = vmatmul.f32.gmra.mxu0 %v345
    %v364 = vpop.f32.mrf.mxu0
    %v365 = vadd.f32 0.0, %v364
    %366 = vdwg.mxu0
    %367 = vmatpush.msra.mxu0 0.0
    %368 = vmatpush.msra.mxu0 0.0
    %369 = vmatpush.msra.mxu0 0.0
    %370 = vmatpush.msra.mxu0 0.0
    %371 = vmatpush.msra.mxu0 0.0
    %372 = vmatpush.msra.mxu0 0.0
    %373 = vmatpush.msra.mxu0 0.0
    %374 = vmatpush.msra.mxu0 0.0
    %375 = vmatpush.msra.mxu0 0.0
    %376 = vmatpush.msra.mxu0 0.0
    %377 = vmatpush.msra.mxu0 0.0
    %378 = vmatpush.msra.mxu0 0.0
    %379 = vmatpush.msra.mxu0 %v133
    %380 = vmatpush.msra.mxu0 %v132
    %381 = vmatpush.msra.mxu0 %v131
    %382 = vmatpush.msra.mxu0 %v130
    %383 = vmatmul.f32.gmra.mxu0 %v345
    %v384 = vpop.f32.mrf.mxu0
    %v385 = vadd.f32 0.0, %v384
    %386 = vdwg.mxu0
    %387 = vmatpush.msra.mxu0 0.0
    %388 = vmatpush.msra.mxu0 0.0
    %389 = vmatpush.msra.mxu0 0.0
    %390 = vmatpush.msra.mxu0 0.0
    %391 = vmatpush.msra.mxu0 0.0
    %392 = vmatpush.msra.mxu0 0.0
    %393 = vmatpush.msra.mxu0 0.0
    %394 = vmatpush.msra.mxu0 0.0
    %395 = vmatpush.msra.mxu0 0.0
    %396 = vmatpush.msra.mxu0 0.0
    %397 = vmatpush.msra.mxu0 0.0
    %398 = vmatpush.msra.mxu0 0.0
    %399 = vmatpush.msra.mxu0 %v138
    %400 = vmatpush.msra.mxu0 %v137
    %401 = vmatpush.msra.mxu0 %v136
    %402 = vmatpush.msra.mxu0 %v135
    %403 = vmatmul.f32.gmra.mxu0 %v345
    %v404 = vpop.f32.mrf.mxu0
    %v405 = vadd.f32 %v275, %v404
    %406 = vdwg.mxu0
    %v408 = vrot.slane %v365, 6
    %v410 = vadd.f32 %v174, %v408
    %v411 = vxor.u32 %v410, 2147483648
    %v412 = vmul.f32 %v411, 1.442695
    %v413 = vpow.pop %v412
    %v414 = vadd.f32 %v413, 1.0
    %v415 = vrcp.pop %v414
    %v416 = vmul.f32 %v414, %v415
    %v417 = vsub.f32 1.0, %v416
    %v418 = vmul.f32 %v415, %v417
    %v419 = vadd.f32 %v415, %v418
    %vm420 = vweird.f32 %v414
    %vm421 = vweird.f32 %v415
    %vm422 = vmor %vm420, %vm421
    %v423 = vsel %vm422, %v415, %v419
    %v424 = vand.u32 2147483647, %v414
    %vm425 = vcmp.eq.f32.partialorder %v424, 8.507059e+37
    %v426 = vand.u32 %v414, 2147483648
    %v427 = vor.u32 1.1754944e-38, %v426
    %v428 = vsel %vm425, %v427, %v423
    %v429 = vmul.f32 1.0, %v428
    %v431 = vrot.slane %v385, 6
    %v433 = vadd.f32 %v200, %v431
    %v434 = vxor.u32 %v433, 2147483648
    %v435 = vmul.f32 %v434, 1.442695
    %v436 = vpow.pop %v435
    %v437 = vadd.f32 %v436, 1.0
    %v438 = vrcp.pop %v437
    %v439 = vmul.f32 %v437, %v438
    %v440 = vsub.f32 1.0, %v439
    %v441 = vmul.f32 %v438, %v440
    %v442 = vadd.f32 %v438, %v441
    %vm443 = vweird.f32 %v437
    %vm444 = vweird.f32 %v438
    %vm445 = vmor %vm443, %vm444
    %v446 = vsel %vm445, %v438, %v442
    %v447 = vand.u32 2147483647, %v437
    %vm448 = vcmp.eq.f32.partialorder %v447, 8.507059e+37
    %v449 = vand.u32 %v437, 2147483648
    %v450 = vor.u32 1.1754944e-38, %v449
    %v451 = vsel %vm448, %v450, %v446
    %v452 = vmul.f32 1.0, %v451
    %v454 = vrot.slane %v405, 6
    %v456 = vmul.f32 %v429, %v454
    %v457 = vadd.f32 %v226, %v456
    %v458 = vtanh.pop %v457
    %v459 = vsub.f32 1.0, %v452
    %v460 = vmul.f32 %v459, %v458
    %v461 = vrot.slane %v343, 6
    %v463 = vmul.f32 %v452, %v461
    %v464 = vadd.f32 %v460, %v463
    %v466 = vrot.slane %v464, 2
    %v467 = vsel %vm149, %v466, 0
    %469 = vmatpush.msra.mxu0 0.0
    %470 = vmatpush.msra.mxu0 0.0
    %471 = vmatpush.msra.mxu0 0.0
    %472 = vmatpush.msra.mxu0 0.0
    %473 = vmatpush.msra.mxu0 0.0
    %474 = vmatpush.msra.mxu0 0.0
    %475 = vmatpush.msra.mxu0 0.0
    %476 = vmatpush.msra.mxu0 0.0
    %477 = vmatpush.msra.mxu0 0.0
    %478 = vmatpush.msra.mxu0 0.0
    %479 = vmatpush.msra.mxu0 0.0
    %480 = vmatpush.msra.mxu0 0.0
    %481 = vmatpush.msra.mxu0 %v128
    %482 = vmatpush.msra.mxu0 %v127
    %483 = vmatpush.msra.mxu0 %v126
    %484 = vmatpush.msra.mxu0 %v125
    %485 = vmatmul.f32.gmra.mxu0 %v467
    %v486 = vpop.f32.mrf.mxu0
    %v487 = vadd.f32 0.0, %v486
    %488 = vdwg.mxu0
    %489 = vmatpush.msra.mxu0 0.0
    %490 = vmatpush.msra.mxu0 0.0
    %491 = vmatpush.msra.mxu0 0.0
    %492 = vmatpush.msra.mxu0 0.0
    %493 = vmatpush.msra.mxu0 0.0
    %494 = vmatpush.msra.mxu0 0.0
    %495 = vmatpush.msra.mxu0 0.0
    %496 = vmatpush.msra.mxu0 0.0
    %497 = vmatpush.msra.mxu0 0.0
    %498 = vmatpush.msra.mxu0 0.0
    %499 = vmatpush.msra.mxu0 0.0
    %500 = vmatpush.msra.mxu0 0.0
    %501 = vmatpush.msra.mxu0 %v133
    %502 = vmatpush.msra.mxu0 %v132
    %503 = vmatpush.msra.mxu0 %v131
    %504 = vmatpush.msra.mxu0 %v130
    %505 = vmatmul.f32.gmra.mxu0 %v467
    %v506 = vpop.f32.mrf.mxu0
    %v507 = vadd.f32 0.0, %v506
    %508 = vdwg.mxu0
    %509 = vmatpush.msra.mxu0 0.0
    %510 = vmatpush.msra.mxu0 0.0
    %511 = vmatpush.msra.mxu0 0.0
    %512 = vmatpush.msra.mxu0 0.0
    %513 = vmatpush.msra.mxu0 0.0
    %514 = vmatpush.msra.mxu0 0.0
    %515 = vmatpush.msra.mxu0 0.0
    %516 = vmatpush.msra.mxu0 0.0
    %517 = vmatpush.msra.mxu0 0.0
    %518 = vmatpush.msra.mxu0 0.0
    %519 = vmatpush.msra.mxu0 0.0
    %520 = vmatpush.msra.mxu0 0.0
    %521 = vmatpush.msra.mxu0 %v138
    %522 = vmatpush.msra.mxu0 %v137
    %523 = vmatpush.msra.mxu0 %v136
    %524 = vmatpush.msra.mxu0 %v135
    %525 = vmatmul.f32.gmra.mxu0 %v467
    %v526 = vpop.f32.mrf.mxu0
    %v527 = vadd.f32 %v275, %v526
    %528 = vdwg.mxu0
    %v530 = vrot.slane %v487, 4
    %v532 = vadd.f32 %v174, %v530
    %v533 = vxor.u32 %v532, 2147483648
    %v534 = vmul.f32 %v533, 1.442695
    %v535 = vpow.pop %v534
    %v536 = vadd.f32 %v535, 1.0
    %v537 = vrcp.pop %v536
    %v538 = vmul.f32 %v536, %v537
    %v539 = vsub.f32 1.0, %v538
    %v540 = vmul.f32 %v537, %v539
    %v541 = vadd.f32 %v537, %v540
    %vm542 = vweird.f32 %v536
    %vm543 = vweird.f32 %v537
    %vm544 = vmor %vm542, %vm543
    %v545 = vsel %vm544, %v537, %v541
    %v546 = vand.u32 2147483647, %v536
    %vm547 = vcmp.eq.f32.partialorder %v546, 8.507059e+37
    %v548 = vand.u32 %v536, 2147483648
    %v549 = vor.u32 1.1754944e-38, %v548
    %v550 = vsel %vm547, %v549, %v545
    %v551 = vmul.f32 1.0, %v550
    %v553 = vrot.slane %v507, 4
    %v555 = vadd.f32 %v200, %v553
    %v556 = vxor.u32 %v555, 2147483648
    %v557 = vmul.f32 %v556, 1.442695
    %v558 = vpow.pop %v557
    %v559 = vadd.f32 %v558, 1.0
    %v560 = vrcp.pop %v559
    %v561 = vmul.f32 %v559, %v560
    %v562 = vsub.f32 1.0, %v561
    %v563 = vmul.f32 %v560, %v562
    %v564 = vadd.f32 %v560, %v563
    %vm565 = vweird.f32 %v559
    %vm566 = vweird.f32 %v560
    %vm567 = vmor %vm565, %vm566
    %v568 = vsel %vm567, %v560, %v564
    %v569 = vand.u32 2147483647, %v559
    %vm570 = vcmp.eq.f32.partialorder %v569, 8.507059e+37
    %v571 = vand.u32 %v559, 2147483648
    %v572 = vor.u32 1.1754944e-38, %v571
    %v573 = vsel %vm570, %v572, %v568
    %v574 = vmul.f32 1.0, %v573
    %v576 = vrot.slane %v527, 4
    %v578 = vmul.f32 %v551, %v576
    %v579 = vadd.f32 %v226, %v578
    %v580 = vtanh.pop %v579
    %v581 = vsub.f32 1.0, %v574
    %v582 = vmul.f32 %v581, %v580
    %v583 = vrot.slane %v464, 6
    %v585 = vmul.f32 %v574, %v583
    %v586 = vadd.f32 %v582, %v585
    %v588 = vrot.slane %v586, 4
    %v589 = vsel %vm149, %v588, 0
    %591 = vmatpush.msra.mxu0 0.0
    %592 = vmatpush.msra.mxu0 0.0
    %593 = vmatpush.msra.mxu0 0.0
    %594 = vmatpush.msra.mxu0 0.0
    %595 = vmatpush.msra.mxu0 0.0
    %596 = vmatpush.msra.mxu0 0.0
    %597 = vmatpush.msra.mxu0 0.0
    %598 = vmatpush.msra.mxu0 0.0
    %599 = vmatpush.msra.mxu0 0.0
    %600 = vmatpush.msra.mxu0 0.0
    %601 = vmatpush.msra.mxu0 0.0
    %602 = vmatpush.msra.mxu0 0.0
    %603 = vmatpush.msra.mxu0 %v128
    %604 = vmatpush.msra.mxu0 %v127
    %605 = vmatpush.msra.mxu0 %v126
    %606 = vmatpush.msra.mxu0 %v125
    %607 = vmatmul.f32.gmra.mxu0 %v589
    %v608 = vpop.f32.mrf.mxu0
    %v609 = vadd.f32 0.0, %v608
    %610 = vdwg.mxu0
    %611 = vmatpush.msra.mxu0 0.0
    %612 = vmatpush.msra.mxu0 0.0
    %613 = vmatpush.msra.mxu0 0.0
    %614 = vmatpush.msra.mxu0 0.0
    %615 = vmatpush.msra.mxu0 0.0
    %616 = vmatpush.msra.mxu0 0.0
    %617 = vmatpush.msra.mxu0 0.0
    %618 = vmatpush.msra.mxu0 0.0
    %619 = vmatpush.msra.mxu0 0.0
    %620 = vmatpush.msra.mxu0 0.0
    %621 = vmatpush.msra.mxu0 0.0
    %622 = vmatpush.msra.mxu0 0.0
    %623 = vmatpush.msra.mxu0 %v133
    %624 = vmatpush.msra.mxu0 %v132
    %625 = vmatpush.msra.mxu0 %v131
    %626 = vmatpush.msra.mxu0 %v130
    %627 = vmatmul.f32.gmra.mxu0 %v589
    %v628 = vpop.f32.mrf.mxu0
    %v629 = vadd.f32 0.0, %v628
    %630 = vdwg.mxu0
    %631 = vmatpush.msra.mxu0 0.0
    %632 = vmatpush.msra.mxu0 0.0
    %633 = vmatpush.msra.mxu0 0.0
    %634 = vmatpush.msra.mxu0 0.0
    %635 = vmatpush.msra.mxu0 0.0
    %636 = vmatpush.msra.mxu0 0.0
    %637 = vmatpush.msra.mxu0 0.0
    %638 = vmatpush.msra.mxu0 0.0
    %639 = vmatpush.msra.mxu0 0.0
    %640 = vmatpush.msra.mxu0 0.0
    %641 = vmatpush.msra.mxu0 0.0
    %642 = vmatpush.msra.mxu0 0.0
    %643 = vmatpush.msra.mxu0 %v138
    %644 = vmatpush.msra.mxu0 %v137
    %645 = vmatpush.msra.mxu0 %v136
    %646 = vmatpush.msra.mxu0 %v135
    %647 = vmatmul.f32.gmra.mxu0 %v589
    %v648 = vpop.f32.mrf.mxu0
    %v649 = vadd.f32 %v275, %v648
    %650 = vdwg.mxu0
    %v652 = vrot.slane %v609, 2
    %v654 = vadd.f32 %v174, %v652
    %v655 = vxor.u32 %v654, 2147483648
    %v656 = vmul.f32 %v655, 1.442695
    %v657 = vpow.pop %v656
    %v658 = vadd.f32 %v657, 1.0
    %v659 = vrcp.pop %v658
    %v660 = vmul.f32 %v658, %v659
    %v661 = vsub.f32 1.0, %v660
    %v662 = vmul.f32 %v659, %v661
    %v663 = vadd.f32 %v659, %v662
    %vm664 = vweird.f32 %v658
    %vm665 = vweird.f32 %v659
    %vm666 = vmor %vm664, %vm665
    %v667 = vsel %vm666, %v659, %v663
    %v668 = vand.u32 2147483647, %v658
    %vm669 = vcmp.eq.f32.partialorder %v668, 8.507059e+37
    %v670 = vand.u32 %v658, 2147483648
    %v671 = vor.u32 1.1754944e-38, %v670
    %v672 = vsel %vm669, %v671, %v667
    %v673 = vmul.f32 1.0, %v672
    %v675 = vrot.slane %v629, 2
    %v677 = vadd.f32 %v200, %v675
    %v678 = vxor.u32 %v677, 2147483648
    %v679 = vmul.f32 %v678, 1.442695
    %v680 = vpow.pop %v679
    %v681 = vadd.f32 %v680, 1.0
    %v682 = vrcp.pop %v681
    %v683 = vmul.f32 %v681, %v682
    %v684 = vsub.f32 1.0, %v683
    %v685 = vmul.f32 %v682, %v684
    %v686 = vadd.f32 %v682, %v685
    %vm687 = vweird.f32 %v681
    %vm688 = vweird.f32 %v682
    %vm689 = vmor %vm687, %vm688
    %v690 = vsel %vm689, %v682, %v686
    %v691 = vand.u32 2147483647, %v681
    %vm692 = vcmp.eq.f32.partialorder %v691, 8.507059e+37
    %v693 = vand.u32 %v681, 2147483648
    %v694 = vor.u32 1.1754944e-38, %v693
    %v695 = vsel %vm692, %v694, %v690
    %v696 = vmul.f32 1.0, %v695
    %v698 = vrot.slane %v649, 2
    %v700 = vmul.f32 %v673, %v698
    %v701 = vadd.f32 %v226, %v700
    %v702 = vtanh.pop %v701
    %v703 = vsub.f32 1.0, %v696
    %v704 = vmul.f32 %v703, %v702
    %v705 = vrot.slane %v586, 6
    %v707 = vmul.f32 %v696, %v705
    %v708 = vadd.f32 %v704, %v707
    %v710 = vrot.slane %v708, 6
    %v711 = vsel %vm149, %v710, 0
    %713 = vmatpush.msra.mxu0 0.0
    %714 = vmatpush.msra.mxu0 0.0
    %715 = vmatpush.msra.mxu0 0.0
    %716 = vmatpush.msra.mxu0 0.0
    %717 = vmatpush.msra.mxu0 0.0
    %718 = vmatpush.msra.mxu0 0.0
    %719 = vmatpush.msra.mxu0 0.0
    %720 = vmatpush.msra.mxu0 0.0
    %721 = vmatpush.msra.mxu0 0.0
    %722 = vmatpush.msra.mxu0 0.0
    %723 = vmatpush.msra.mxu0 0.0
    %724 = vmatpush.msra.mxu0 0.0
    %725 = vmatpush.msra.mxu0 %v128
    %726 = vmatpush.msra.mxu0 %v127
    %727 = vmatpush.msra.mxu0 %v126
    %728 = vmatpush.msra.mxu0 %v125
    %729 = vmatmul.f32.gmra.mxu0 %v711
    %v730 = vpop.f32.mrf.mxu0
    %v731 = vadd.f32 0.0, %v730
    %732 = vdwg.mxu0
    %733 = vmatpush.msra.mxu0 0.0
    %734 = vmatpush.msra.mxu0 0.0
    %735 = vmatpush.msra.mxu0 0.0
    %736 = vmatpush.msra.mxu0 0.0
    %737 = vmatpush.msra.mxu0 0.0
    %738 = vmatpush.msra.mxu0 0.0
    %739 = vmatpush.msra.mxu0 0.0
    %740 = vmatpush.msra.mxu0 0.0
    %741 = vmatpush.msra.mxu0 0.0
    %742 = vmatpush.msra.mxu0 0.0
    %743 = vmatpush.msra.mxu0 0.0
    %744 = vmatpush.msra.mxu0 0.0
    %745 = vmatpush.msra.mxu0 %v133
    %746 = vmatpush.msra.mxu0 %v132
    %747 = vmatpush.msra.mxu0 %v131
    %748 = vmatpush.msra.mxu0 %v130
    %749 = vmatmul.f32.gmra.mxu0 %v711
    %v750 = vpop.f32.mrf.mxu0
    %v751 = vadd.f32 0.0, %v750
    %752 = vdwg.mxu0
    %753 = vmatpush.msra.mxu0 0.0
    %754 = vmatpush.msra.mxu0 0.0
    %755 = vmatpush.msra.mxu0 0.0
    %756 = vmatpush.msra.mxu0 0.0
    %757 = vmatpush.msra.mxu0 0.0
    %758 = vmatpush.msra.mxu0 0.0
    %759 = vmatpush.msra.mxu0 0.0
    %760 = vmatpush.msra.mxu0 0.0
    %761 = vmatpush.msra.mxu0 0.0
    %762 = vmatpush.msra.mxu0 0.0
    %763 = vmatpush.msra.mxu0 0.0
    %764 = vmatpush.msra.mxu0 0.0
    %765 = vmatpush.msra.mxu0 %v138
    %766 = vmatpush.msra.mxu0 %v137
    %767 = vmatpush.msra.mxu0 %v136
    %768 = vmatpush.msra.mxu0 %v135
    %769 = vmatmul.f32.gmra.mxu0 %v711
    %v770 = vpop.f32.mrf.mxu0
    %v771 = vadd.f32 %v275, %v770
    %772 = vdwg.mxu0
    %v773 = vadd.f32 %v177, %v731
    %v774 = vxor.u32 %v773, 2147483648
    %v775 = vmul.f32 %v774, 1.442695
    %v776 = vpow.pop %v775
    %v777 = vadd.f32 %v776, 1.0
    %v778 = vrcp.pop %v777
    %v779 = vmul.f32 %v777, %v778
    %v780 = vsub.f32 1.0, %v779
    %v781 = vmul.f32 %v778, %v780
    %v782 = vadd.f32 %v778, %v781
    %vm783 = vweird.f32 %v777
    %vm784 = vweird.f32 %v778
    %vm785 = vmor %vm783, %vm784
    %v786 = vsel %vm785, %v778, %v782
    %v787 = vand.u32 2147483647, %v777
    %vm788 = vcmp.eq.f32.partialorder %v787, 8.507059e+37
    %v789 = vand.u32 %v777, 2147483648
    %v790 = vor.u32 1.1754944e-38, %v789
    %v791 = vsel %vm788, %v790, %v786
    %v792 = vmul.f32 1.0, %v791
    %v793 = vadd.f32 %v203, %v751
    %v794 = vxor.u32 %v793, 2147483648
    %v795 = vmul.f32 %v794, 1.442695
    %v796 = vpow.pop %v795
    %v797 = vadd.f32 %v796, 1.0
    %v798 = vrcp.pop %v797
    %v799 = vmul.f32 %v797, %v798
    %v800 = vsub.f32 1.0, %v799
    %v801 = vmul.f32 %v798, %v800
    %v802 = vadd.f32 %v798, %v801
    %vm803 = vweird.f32 %v797
    %vm804 = vweird.f32 %v798
    %vm805 = vmor %vm803, %vm804
    %v806 = vsel %vm805, %v798, %v802
    %v807 = vand.u32 2147483647, %v797
    %vm808 = vcmp.eq.f32.partialorder %v807, 8.507059e+37
    %v809 = vand.u32 %v797, 2147483648
    %v810 = vor.u32 1.1754944e-38, %v809
    %v811 = vsel %vm808, %v810, %v806
    %v812 = vmul.f32 1.0, %v811
    %v813 = vmul.f32 %v792, %v771
    %v814 = vadd.f32 %v229, %v813
    %v815 = vtanh.pop %v814
    %v816 = vsub.f32 1.0, %v812
    %v817 = vmul.f32 %v816, %v815
    %v819 = vmul.f32 %v812, %v710
    %v820 = vadd.f32 %v817, %v819
    %v822 = vsel %vm149, %v820, 0
    %824 = vmatpush.msra.mxu0 0.0
    %825 = vmatpush.msra.mxu0 0.0
    %826 = vmatpush.msra.mxu0 0.0
    %827 = vmatpush.msra.mxu0 0.0
    %828 = vmatpush.msra.mxu0 0.0
    %829 = vmatpush.msra.mxu0 0.0
    %830 = vmatpush.msra.mxu0 0.0
    %831 = vmatpush.msra.mxu0 0.0
    %832 = vmatpush.msra.mxu0 0.0
    %833 = vmatpush.msra.mxu0 0.0
    %834 = vmatpush.msra.mxu0 0.0
    %835 = vmatpush.msra.mxu0 0.0
    %836 = vmatpush.msra.mxu0 %v128
    %837 = vmatpush.msra.mxu0 %v127
    %838 = vmatpush.msra.mxu0 %v126
    %839 = vmatpush.msra.mxu0 %v125
    %840 = vmatmul.f32.gmra.mxu0 %v822
    %v841 = vpop.f32.mrf.mxu0
    %v842 = vadd.f32 0.0, %v841
    %843 = vdwg.mxu0
    %844 = vmatpush.msra.mxu0 0.0
    %845 = vmatpush.msra.mxu0 0.0
    %846 = vmatpush.msra.mxu0 0.0
    %847 = vmatpush.msra.mxu0 0.0
    %848 = vmatpush.msra.mxu0 0.0
    %849 = vmatpush.msra.mxu0 0.0
    %850 = vmatpush.msra.mxu0 0.0
    %851 = vmatpush.msra.mxu0 0.0
    %852 = vmatpush.msra.mxu0 0.0
    %853 = vmatpush.msra.mxu0 0.0
    %854 = vmatpush.msra.mxu0 0.0
    %855 = vmatpush.msra.mxu0 0.0
    %856 = vmatpush.msra.mxu0 %v133
    %857 = vmatpush.msra.mxu0 %v132
    %858 = vmatpush.msra.mxu0 %v131
    %859 = vmatpush.msra.mxu0 %v130
    %860 = vmatmul.f32.gmra.mxu0 %v822
    %v861 = vpop.f32.mrf.mxu0
    %v862 = vadd.f32 0.0, %v861
    %863 = vdwg.mxu0
    %864 = vmatpush.msra.mxu0 0.0
    %865 = vmatpush.msra.mxu0 0.0
    %866 = vmatpush.msra.mxu0 0.0
    %867 = vmatpush.msra.mxu0 0.0
    %868 = vmatpush.msra.mxu0 0.0
    %869 = vmatpush.msra.mxu0 0.0
    %870 = vmatpush.msra.mxu0 0.0
    %871 = vmatpush.msra.mxu0 0.0
    %872 = vmatpush.msra.mxu0 0.0
    %873 = vmatpush.msra.mxu0 0.0
    %874 = vmatpush.msra.mxu0 0.0
    %875 = vmatpush.msra.mxu0 0.0
    %876 = vmatpush.msra.mxu0 %v138
    %877 = vmatpush.msra.mxu0 %v137
    %878 = vmatpush.msra.mxu0 %v136
    %879 = vmatpush.msra.mxu0 %v135
    %880 = vmatmul.f32.gmra.mxu0 %v822
    %v881 = vpop.f32.mrf.mxu0
    %v882 = vadd.f32 %v275, %v881
    %883 = vdwg.mxu0
    %v885 = vrot.slane %v842, 6
    %v887 = vadd.f32 %v177, %v885
    %v888 = vxor.u32 %v887, 2147483648
    %v889 = vmul.f32 %v888, 1.442695
    %v890 = vpow.pop %v889
    %v891 = vadd.f32 %v890, 1.0
    %v892 = vrcp.pop %v891
    %v893 = vmul.f32 %v891, %v892
    %v894 = vsub.f32 1.0, %v893
    %v895 = vmul.f32 %v892, %v894
    %v896 = vadd.f32 %v892, %v895
    %vm897 = vweird.f32 %v891
    %vm898 = vweird.f32 %v892
    %vm899 = vmor %vm897, %vm898
    %v900 = vsel %vm899, %v892, %v896
    %v901 = vand.u32 2147483647, %v891
    %vm902 = vcmp.eq.f32.partialorder %v901, 8.507059e+37
    %v903 = vand.u32 %v891, 2147483648
    %v904 = vor.u32 1.1754944e-38, %v903
    %v905 = vsel %vm902, %v904, %v900
    %v906 = vmul.f32 1.0, %v905
    %v908 = vrot.slane %v862, 6
    %v910 = vadd.f32 %v203, %v908
    %v911 = vxor.u32 %v910, 2147483648
    %v912 = vmul.f32 %v911, 1.442695
    %v913 = vpow.pop %v912
    %v914 = vadd.f32 %v913, 1.0
    %v915 = vrcp.pop %v914
    %v916 = vmul.f32 %v914, %v915
    %v917 = vsub.f32 1.0, %v916
    %v918 = vmul.f32 %v915, %v917
    %v919 = vadd.f32 %v915, %v918
    %vm920 = vweird.f32 %v914
    %vm921 = vweird.f32 %v915
    %vm922 = vmor %vm920, %vm921
    %v923 = vsel %vm922, %v915, %v919
    %v924 = vand.u32 2147483647, %v914
    %vm925 = vcmp.eq.f32.partialorder %v924, 8.507059e+37
    %v926 = vand.u32 %v914, 2147483648
    %v927 = vor.u32 1.1754944e-38, %v926
    %v928 = vsel %vm925, %v927, %v923
    %v929 = vmul.f32 1.0, %v928
    %v931 = vrot.slane %v882, 6
    %v933 = vmul.f32 %v906, %v931
    %v934 = vadd.f32 %v229, %v933
    %v935 = vtanh.pop %v934
    %v936 = vsub.f32 1.0, %v929
    %v937 = vmul.f32 %v936, %v935
    %v938 = vrot.slane %v820, 6
    %v940 = vmul.f32 %v929, %v938
    %v941 = vadd.f32 %v937, %v940
    %v943 = vrot.slane %v941, 2
    %v944 = vsel %vm149, %v943, 0
    %946 = vmatpush.msra.mxu0 0.0
    %947 = vmatpush.msra.mxu0 0.0
    %948 = vmatpush.msra.mxu0 0.0
    %949 = vmatpush.msra.mxu0 0.0
    %950 = vmatpush.msra.mxu0 0.0
    %951 = vmatpush.msra.mxu0 0.0
    %952 = vmatpush.msra.mxu0 0.0
    %953 = vmatpush.msra.mxu0 0.0
    %954 = vmatpush.msra.mxu0 0.0
    %955 = vmatpush.msra.mxu0 0.0
    %956 = vmatpush.msra.mxu0 0.0
    %957 = vmatpush.msra.mxu0 0.0
    %958 = vmatpush.msra.mxu0 %v128
    %959 = vmatpush.msra.mxu0 %v127
    %960 = vmatpush.msra.mxu0 %v126
    %961 = vmatpush.msra.mxu0 %v125
    %962 = vmatmul.f32.gmra.mxu0 %v944
    %v963 = vpop.f32.mrf.mxu0
    %v964 = vadd.f32 0.0, %v963
    %965 = vdwg.mxu0
    %966 = vmatpush.msra.mxu0 0.0
    %967 = vmatpush.msra.mxu0 0.0
    %968 = vmatpush.msra.mxu0 0.0
    %969 = vmatpush.msra.mxu0 0.0
    %970 = vmatpush.msra.mxu0 0.0
    %971 = vmatpush.msra.mxu0 0.0
    %972 = vmatpush.msra.mxu0 0.0
    %973 = vmatpush.msra.mxu0 0.0
    %974 = vmatpush.msra.mxu0 0.0
    %975 = vmatpush.msra.mxu0 0.0
    %976 = vmatpush.msra.mxu0 0.0
    %977 = vmatpush.msra.mxu0 0.0
    %978 = vmatpush.msra.mxu0 %v133
    %979 = vmatpush.msra.mxu0 %v132
    %980 = vmatpush.msra.mxu0 %v131
    %981 = vmatpush.msra.mxu0 %v130
    %982 = vmatmul.f32.gmra.mxu0 %v944
    %v983 = vpop.f32.mrf.mxu0
    %v984 = vadd.f32 0.0, %v983
    %985 = vdwg.mxu0
    %986 = vmatpush.msra.mxu0 0.0
    %987 = vmatpush.msra.mxu0 0.0
    %988 = vmatpush.msra.mxu0 0.0
    %989 = vmatpush.msra.mxu0 0.0
    %990 = vmatpush.msra.mxu0 0.0
    %991 = vmatpush.msra.mxu0 0.0
    %992 = vmatpush.msra.mxu0 0.0
    %993 = vmatpush.msra.mxu0 0.0
    %994 = vmatpush.msra.mxu0 0.0
    %995 = vmatpush.msra.mxu0 0.0
    %996 = vmatpush.msra.mxu0 0.0
    %997 = vmatpush.msra.mxu0 0.0
    %998 = vmatpush.msra.mxu0 %v138
    %999 = vmatpush.msra.mxu0 %v137
    %1000 = vmatpush.msra.mxu0 %v136
    %1001 = vmatpush.msra.mxu0 %v135
    %1002 = vmatmul.f32.gmra.mxu0 %v944
    %v1003 = vpop.f32.mrf.mxu0
    %v1004 = vadd.f32 %v275, %v1003
    %1005 = vdwg.mxu0
    %v1007 = vrot.slane %v964, 4
    %v1009 = vadd.f32 %v177, %v1007
    %v1010 = vxor.u32 %v1009, 2147483648
    %v1011 = vmul.f32 %v1010, 1.442695
    %v1012 = vpow.pop %v1011
    %v1013 = vadd.f32 %v1012, 1.0
    %v1014 = vrcp.pop %v1013
    %v1015 = vmul.f32 %v1013, %v1014
    %v1016 = vsub.f32 1.0, %v1015
    %v1017 = vmul.f32 %v1014, %v1016
    %v1018 = vadd.f32 %v1014, %v1017
    %vm1019 = vweird.f32 %v1013
    %vm1020 = vweird.f32 %v1014
    %vm1021 = vmor %vm1019, %vm1020
    %v1022 = vsel %vm1021, %v1014, %v1018
    %v1023 = vand.u32 2147483647, %v1013
    %vm1024 = vcmp.eq.f32.partialorder %v1023, 8.507059e+37
    %v1025 = vand.u32 %v1013, 2147483648
    %v1026 = vor.u32 1.1754944e-38, %v1025
    %v1027 = vsel %vm1024, %v1026, %v1022
    %v1028 = vmul.f32 1.0, %v1027
    %v1030 = vrot.slane %v984, 4
    %v1032 = vadd.f32 %v203, %v1030
    %v1033 = vxor.u32 %v1032, 2147483648
    %v1034 = vmul.f32 %v1033, 1.442695
    %v1035 = vpow.pop %v1034
    %v1036 = vadd.f32 %v1035, 1.0
    %v1037 = vrcp.pop %v1036
    %v1038 = vmul.f32 %v1036, %v1037
    %v1039 = vsub.f32 1.0, %v1038
    %v1040 = vmul.f32 %v1037, %v1039
    %v1041 = vadd.f32 %v1037, %v1040
    %vm1042 = vweird.f32 %v1036
    %vm1043 = vweird.f32 %v1037
    %vm1044 = vmor %vm1042, %vm1043
    %v1045 = vsel %vm1044, %v1037, %v1041
    %v1046 = vand.u32 2147483647, %v1036
    %vm1047 = vcmp.eq.f32.partialorder %v1046, 8.507059e+37
    %v1048 = vand.u32 %v1036, 2147483648
    %v1049 = vor.u32 1.1754944e-38, %v1048
    %v1050 = vsel %vm1047, %v1049, %v1045
    %v1051 = vmul.f32 1.0, %v1050
    %v1053 = vrot.slane %v1004, 4
    %v1055 = vmul.f32 %v1028, %v1053
    %v1056 = vadd.f32 %v229, %v1055
    %v1057 = vtanh.pop %v1056
    %v1058 = vsub.f32 1.0, %v1051
    %v1059 = vmul.f32 %v1058, %v1057
    %v1060 = vrot.slane %v941, 6
    %v1062 = vmul.f32 %v1051, %v1060
    %v1063 = vadd.f32 %v1059, %v1062
    %v1065 = vrot.slane %v1063, 4
    %v1066 = vsel %vm149, %v1065, 0
    %1068 = vmatpush.msra.mxu0 0.0
    %1069 = vmatpush.msra.mxu0 0.0
    %1070 = vmatpush.msra.mxu0 0.0
    %1071 = vmatpush.msra.mxu0 0.0
    %1072 = vmatpush.msra.mxu0 0.0
    %1073 = vmatpush.msra.mxu0 0.0
    %1074 = vmatpush.msra.mxu0 0.0
    %1075 = vmatpush.msra.mxu0 0.0
    %1076 = vmatpush.msra.mxu0 0.0
    %1077 = vmatpush.msra.mxu0 0.0
    %1078 = vmatpush.msra.mxu0 0.0
    %1079 = vmatpush.msra.mxu0 0.0
    %1080 = vmatpush.msra.mxu0 %v128
    %1081 = vmatpush.msra.mxu0 %v127
    %1082 = vmatpush.msra.mxu0 %v126
    %1083 = vmatpush.msra.mxu0 %v125
    %1084 = vmatmul.f32.gmra.mxu0 %v1066
    %v1085 = vpop.f32.mrf.mxu0
    %v1086 = vadd.f32 0.0, %v1085
    %1087 = vdwg.mxu0
    %1088 = vmatpush.msra.mxu0 0.0
    %1089 = vmatpush.msra.mxu0 0.0
    %1090 = vmatpush.msra.mxu0 0.0
    %1091 = vmatpush.msra.mxu0 0.0
    %1092 = vmatpush.msra.mxu0 0.0
    %1093 = vmatpush.msra.mxu0 0.0
    %1094 = vmatpush.msra.mxu0 0.0
    %1095 = vmatpush.msra.mxu0 0.0
    %1096 = vmatpush.msra.mxu0 0.0
    %1097 = vmatpush.msra.mxu0 0.0
    %1098 = vmatpush.msra.mxu0 0.0
    %1099 = vmatpush.msra.mxu0 0.0
    %1100 = vmatpush.msra.mxu0 %v133
    %1101 = vmatpush.msra.mxu0 %v132
    %1102 = vmatpush.msra.mxu0 %v131
    %1103 = vmatpush.msra.mxu0 %v130
    %1104 = vmatmul.f32.gmra.mxu0 %v1066
    %v1105 = vpop.f32.mrf.mxu0
    %v1106 = vadd.f32 0.0, %v1105
    %1107 = vdwg.mxu0
    %1108 = vmatpush.msra.mxu0 0.0
    %1109 = vmatpush.msra.mxu0 0.0
    %1110 = vmatpush.msra.mxu0 0.0
    %1111 = vmatpush.msra.mxu0 0.0
    %1112 = vmatpush.msra.mxu0 0.0
    %1113 = vmatpush.msra.mxu0 0.0
    %1114 = vmatpush.msra.mxu0 0.0
    %1115 = vmatpush.msra.mxu0 0.0
    %1116 = vmatpush.msra.mxu0 0.0
    %1117 = vmatpush.msra.mxu0 0.0
    %1118 = vmatpush.msra.mxu0 0.0
    %1119 = vmatpush.msra.mxu0 0.0
    %1120 = vmatpush.msra.mxu0 %v138
    %1121 = vmatpush.msra.mxu0 %v137
    %1122 = vmatpush.msra.mxu0 %v136
    %1123 = vmatpush.msra.mxu0 %v135
    %1124 = vmatmul.f32.gmra.mxu0 %v1066
    %v1125 = vpop.f32.mrf.mxu0
    %v1126 = vadd.f32 %v275, %v1125
    %1127 = vdwg.mxu0
    %v1129 = vrot.slane %v1086, 2
    %v1131 = vadd.f32 %v177, %v1129
    %v1132 = vxor.u32 %v1131, 2147483648
    %v1133 = vmul.f32 %v1132, 1.442695
    %v1134 = vpow.pop %v1133
    %v1135 = vadd.f32 %v1134, 1.0
    %v1136 = vrcp.pop %v1135
    %v1137 = vmul.f32 %v1135, %v1136
    %v1138 = vsub.f32 1.0, %v1137
    %v1139 = vmul.f32 %v1136, %v1138
    %v1140 = vadd.f32 %v1136, %v1139
    %vm1141 = vweird.f32 %v1135
    %vm1142 = vweird.f32 %v1136
    %vm1143 = vmor %vm1141, %vm1142
    %v1144 = vsel %vm1143, %v1136, %v1140
    %v1145 = vand.u32 2147483647, %v1135
    %vm1146 = vcmp.eq.f32.partialorder %v1145, 8.507059e+37
    %v1147 = vand.u32 %v1135, 2147483648
    %v1148 = vor.u32 1.1754944e-38, %v1147
    %v1149 = vsel %vm1146, %v1148, %v1144
    %v1150 = vmul.f32 1.0, %v1149
    %v1152 = vrot.slane %v1106, 2
    %v1154 = vadd.f32 %v203, %v1152
    %v1155 = vxor.u32 %v1154, 2147483648
    %v1156 = vmul.f32 %v1155, 1.442695
    %v1157 = vpow.pop %v1156
    %v1158 = vadd.f32 %v1157, 1.0
    %v1159 = vrcp.pop %v1158
    %v1160 = vmul.f32 %v1158, %v1159
    %v1161 = vsub.f32 1.0, %v1160
    %v1162 = vmul.f32 %v1159, %v1161
    %v1163 = vadd.f32 %v1159, %v1162
    %vm1164 = vweird.f32 %v1158
    %vm1165 = vweird.f32 %v1159
    %vm1166 = vmor %vm1164, %vm1165
    %v1167 = vsel %vm1166, %v1159, %v1163
    %v1168 = vand.u32 2147483647, %v1158
    %vm1169 = vcmp.eq.f32.partialorder %v1168, 8.507059e+37
    %v1170 = vand.u32 %v1158, 2147483648
    %v1171 = vor.u32 1.1754944e-38, %v1170
    %v1172 = vsel %vm1169, %v1171, %v1167
    %v1173 = vmul.f32 1.0, %v1172
    %v1175 = vrot.slane %v1126, 2
    %v1177 = vmul.f32 %v1150, %v1175
    %v1178 = vadd.f32 %v229, %v1177
    %v1179 = vtanh.pop %v1178
    %v1180 = vsub.f32 1.0, %v1173
    %v1181 = vmul.f32 %v1180, %v1179
    %v1182 = vrot.slane %v1063, 6
    %v1184 = vmul.f32 %v1173, %v1182
    %v1185 = vadd.f32 %v1181, %v1184
    %v1186 = vmul.f32 %v1185, %v1185
    %vm1187 = vcmask 261126
    %v1188 = vsel %vm1187, %v1186, 0.0
    %1189 = vadd.xlane.f32.xlu0 %v1188
    %v1190 = vpop.xlane.xlu0 %1189
    %v1191 = vadd.f32 %v1190, 1e-12
    %v1192 = vrsqrt.pop %v1191
    %v1193 = vmul.f32 %v1192, %v1191
    %v1194 = vmul.f32 %v1193, %v1192
    %v1195 = vmul.f32 0.5, %v1194
    %v1196 = vsub.f32 1.5, %v1195
    %v1197 = vmul.f32 %v1192, %v1196
    %vm1198 = vweird.f32 %v1191
    %vm1199 = vweird.f32 %v1192
    %vm1200 = vmor %vm1198, %vm1199
    %v1201 = vsel %vm1200, %v1192, %v1197
    %v1202 = vmul.f32 %v1185, %v1201
    %v1203 = vld [vmem:[%s5] sm:$0xff]
    %v1204 = vld [vmem:[%s5 + $0x8] sm:$0xff]
    %v1205 = vld [vmem:[%s5 + $0x10] sm:$0xff]
    %v1206 = vld [vmem:[%s5 + $0x18] sm:$0xff]
    %v1207 = vld [vmem:[%s6] sm:$0x1]
    %v1209 = vperm.slane %v1207, 0
    %v1212 = vrot.slane %v1202, 6
    %v1213 = vsel %vm149, %v1212, 0
    %1215 = vmatpush.msra.mxu0 0.0
    %1216 = vmatpush.msra.mxu0 0.0
    %1217 = vmatpush.msra.mxu0 0.0
    %1218 = vmatpush.msra.mxu0 0.0
    %1219 = vmatpush.msra.mxu0 0.0
    %1220 = vmatpush.msra.mxu0 0.0
    %1221 = vmatpush.msra.mxu0 0.0
    %1222 = vmatpush.msra.mxu0 0.0
    %1223 = vmatpush.msra.mxu0 0.0
    %1224 = vmatpush.msra.mxu0 0.0
    %1225 = vmatpush.msra.mxu0 0.0
    %1226 = vmatpush.msra.mxu0 0.0
    %1227 = vmatpush.msra.mxu0 %v1206
    %1228 = vmatpush.msra.mxu0 %v1205
    %1229 = vmatpush.msra.mxu0 %v1204
    %1230 = vmatpush.msra.mxu0 %v1203
    %1231 = vmatmul.f32.gmra.mxu0 %v1213
    %v1232 = vpop.f32.mrf.mxu0
    %v1233 = vadd.f32 %v1209, %v1232
    %1234 = vdwg.mxu0
    %s1235 = sld [smem:[#allocation2]]
    %vm1236 = vcmp.ge.f32.partialorder %v1233, 0.0
    %v1237 = vstv %s1235
    %v1238 = vmul.f32 %v1233, %v1237
    %v1239 = vsel %vm1236, %v1233, %v1238
    %vm1240 = vcmask 25600
    %1241 = vst.msk [vmem:[#allocation8] sm:$0x3] %vm1240, %v1239
    // Predicated region
    $region42: #{model_forward.1} parent=1 // pred_check
      _
    $region43: #{model_forward.1} parent=1 // pred_check_branch
      %1243 = sbr.rel (0) target = $region45
    $region44: #{model_forward.1} parent=1 // pred_region
      %1245 = vsyncadd [#allocation5], 0
      %s1247 = sshll.u32 [#allocation8], 4
      %s1248 = int_to_ptr.vmem [resolvable:$true] %s1247
      %s1249 = sshll.u32 %s8, 4
      %s1250 = int_to_ptr.hbm [resolvable:$true] %s1249
      %1252 = dma.vmem_to_hbm [thread:$0]  %s1248, 32, %s1250, [#allocation5]
    $region45: #{model_forward.1} parent=1 // pred_fallthru
      _
    // Predicated region
    $region46: #{model_forward.1} parent=1 // pred_check
      _
    $region47: #{model_forward.1} parent=1 // pred_check_branch
      %1254 = sbr.rel (0) target = $region49
    $region48: #{model_forward.1} parent=1 // pred_region
      %1256 = dma.done [#allocation5], 32
    $region49: #{model_forward.1} parent=1 // pred_fallthru
      _
    %1257 = vsyncpa [#allocation4], 1
    %1258 = vsyncpa [#allocation7], 1
    %1259 = vsyncpa [#allocation5], 1

</llo_original>
